<compile_context>
chip_gen: v7x
topology: tpu7x:2x2x1
jax: 0.10.0
libtpu: 0.0.40
codegen_flags: <defaults>
</compile_context>

<pallas_src>
import jax
import jax.numpy as jnp
from jax.experimental import pallas as pl
from jax.experimental.pallas import tpu as pltpu


INPUT_DIM = 4
OUTPUT_DIM = 8
NEG_SLOPE = 0.01            # F.leaky_relu default negative_slope
LANE = 128
SUBLANE = 8


def _round_up(n, m):
    return ((n + m - 1) // m) * m


def layer_dims(input_dim, output_dim):
    """Replicates the dims implied by Actor.__init__."""
    dims = [input_dim, 60 * input_dim]              # input_layer
    for i in range(2, 8):                           # hidden_layers
        dims.append(int(60 * input_dim / i))
    dims.append(output_dim)                         # output_layer
    return dims                                     # 9 entries -> 8 Linear layers


def padded_layer_dims(input_dim, output_dim):
    return [_round_up(d, LANE) for d in layer_dims(input_dim, output_dim)]


def init_params(key, input_dim, output_dim):
    """PyTorch-style init U(-1/sqrt(fan_in), 1/sqrt(fan_in)), zero-padded once
    to 128-multiples on both in/out dims.  Weights are stored transposed as
    (in, out) in bf16, biases as (1, out_pad) f32.  Zero padding is exact:
    padded activation columns stay identically 0 through every layer."""
    dims = layer_dims(input_dim, output_dim)
    pdims = padded_layer_dims(input_dim, output_dim)
    params = []
    for li in range(len(dims) - 1):
        fan_in, fan_out = dims[li], dims[li + 1]
        pin, pout = pdims[li], pdims[li + 1]
        key, kw, kb = jax.random.split(key, 3)
        bound = 1.0 / float(fan_in) ** 0.5
        w = jax.random.uniform(kw, (fan_in, fan_out), jnp.float32, -bound, bound)
        b = jax.random.uniform(kb, (fan_out,), jnp.float32, -bound, bound)
        wp = jnp.zeros((pin, pout), jnp.float32).at[:fan_in, :fan_out].set(w)
        bp = jnp.zeros((1, pout), jnp.float32).at[0, :fan_out].set(b)
        params.append((wp.astype(jnp.bfloat16), bp))
    return params


# ---------------------------------------------------------------------------
# Fused Pallas kernel: per-group MLP + masked segment softmax
# ---------------------------------------------------------------------------

def _actor_fused_kernel(lens_ref, x_ref, *rest):
    """rest = (w0, b0, ..., w7, b7, out_ref).  One grid step == one group.

    Runs the 8-layer MLP on this group's (padded) rows, then a softmax over
    the flattened valid (length x OUTPUT_DIM) scores, masking padded rows and
    padded output lanes."""
    out_ref = rest[-1]
    param_refs = rest[:-1]
    n_layers = len(param_refs) // 2

    g = pl.program_id(0)
    length = lens_ref[g]                       # scalar int32 from SMEM

    h = x_ref[...]                             # (MAX_LEN_PAD, IN_PAD) bf16
    y = None
    for li in range(n_layers):
        w = param_refs[2 * li][...]            # bf16 (in_pad, out_pad)
        b = param_refs[2 * li + 1][...]        # f32  (1, out_pad)
        acc = jnp.dot(h, w, preferred_element_type=jnp.float32) + b
        if li < n_layers - 1:
            acc = jnp.where(acc > 0, acc, NEG_SLOPE * acc)   # leaky_relu
            h = acc.astype(jnp.bfloat16)
        else:
            y = jnp.maximum(acc, 0.0)          # relu, f32 (MAX_LEN_PAD, OUT_PAD)

    # Masked softmax over the flattened valid region of this group.
    rows = jax.lax.broadcasted_iota(jnp.int32, y.shape, 0)
    cols = jax.lax.broadcasted_iota(jnp.int32, y.shape, 1)
    mask = (rows < length) & (cols < OUTPUT_DIM)

    neg = jnp.float32(-1e30)
    m = jnp.max(jnp.where(mask, y, neg), axis=(0, 1), keepdims=True)
    e = jnp.where(mask, jnp.exp(y - m), 0.0)
    s = jnp.sum(e, axis=(0, 1), keepdims=True)
    out_ref[...] = e * pl.reciprocal(s, approx=True)


@jax.jit
def _actor_core(params, x_groups, lengths):
    """x_groups: (G, MAX_LEN_PAD, IN_PAD) bf16; lengths: (G,) int32.
    Returns (G, MAX_LEN_PAD, OUT_PAD) f32 softmax probabilities (zeros in the
    padded region)."""
    G, max_len_pad, in_pad = x_groups.shape
    out_pad = params[-1][0].shape[1]
    flat = [t for wb in params for t in wb]

    # Weights/biases: full-array blocks, constant index map -> VMEM resident.
    weight_specs = [pl.BlockSpec(p.shape, lambda g, lens: (0, 0)) for p in flat]

    grid_spec = pltpu.PrefetchScalarGridSpec(
        num_scalar_prefetch=1,
        grid=(G,),
        in_specs=[pl.BlockSpec((None, max_len_pad, in_pad),
                               lambda g, lens: (g, 0, 0))] + weight_specs,
        out_specs=pl.BlockSpec((None, max_len_pad, out_pad),
                               lambda g, lens: (g, 0, 0)),
    )
    return pl.pallas_call(
        _actor_fused_kernel,
        out_shape=jax.ShapeDtypeStruct((G, max_len_pad, out_pad), jnp.float32),
        grid_spec=grid_spec,
        compiler_params=pltpu.CompilerParams(
            dimension_semantics=("parallel",)),
    )(lengths, x_groups, *flat)


# ---------------------------------------------------------------------------
# Actor.forward: ragged nested input -> list of per-group softmax vectors
# ---------------------------------------------------------------------------

def actor_forward(params, X):
    lengths = [len(g) for g in X]
    G = len(X)
    in_pad = params[0][0].shape[0]
    out_dim_pad = params[-1][0].shape[1]
    del out_dim_pad
    max_len_pad = max(SUBLANE, _round_up(max(lengths), SUBLANE))

    # Host glue: pack ragged groups into one (G, MAX_LEN_PAD, IN_PAD) slab.
    slabs = []
    for grp in X:
        rows = jnp.stack([jnp.asarray(v, jnp.float32) for v in grp], axis=0)
        rows = jnp.pad(rows, ((0, max_len_pad - rows.shape[0]),
                              (0, in_pad - rows.shape[1])))
        slabs.append(rows)
    x_groups = jnp.stack(slabs, axis=0).astype(jnp.bfloat16)
    lens = jnp.asarray(lengths, jnp.int32)

    probs = _actor_core(params, x_groups, lens)      # (G, MAX_LEN_PAD, OUT_PAD)
    return [probs[i, :lengths[i], :OUTPUT_DIM].reshape(-1) for i in range(G)]


# ---------------------------------------------------------------------------
# Pure-JAX reference (same bf16 matmul math) for correctness checking
# ---------------------------------------------------------------------------

def reference_forward(params, X):
    lengths = [len(g) for g in X]
    in_pad = params[0][0].shape[0]
    rows = jnp.stack([jnp.asarray(v, jnp.float32) for g in X for v in g], axis=0)
    x = jnp.pad(rows, ((0, 0), (0, in_pad - rows.shape[1]))).astype(jnp.bfloat16)

    h = x
    n_layers = len(params)
    y = None
    for li, (w, b) in enumerate(params):
        acc = jnp.dot(h, w, preferred_element_type=jnp.float32) + b
        if li < n_layers - 1:
            acc = jnp.where(acc > 0, acc, NEG_SLOPE * acc)
            h = acc.astype(jnp.bfloat16)
        else:
            y = jnp.maximum(acc, 0.0)
    y = y[:, :OUTPUT_DIM]

    outs, c = [], 0
    for l in lengths:
        outs.append(jax.nn.softmax(y[c:c + l].reshape(-1)))
        c += l
    return outs


if __name__ == "__main__":
    key = jax.random.PRNGKey(0)
    key_params, key_data = jax.random.split(key)

    params = init_params(key_params, INPUT_DIM, OUTPUT_DIM)

    # Ragged nested input: 2 groups with lengths [3, 5], each item a 4-dim
    # feature vector (matches Actor.forward's nested-list contract).
    group_lengths = [3, 5]
    n_items = sum(group_lengths)
    data = jax.random.normal(key_data, (n_items, INPUT_DIM), jnp.float32)
    X, c = [], 0
    for l in group_lengths:
        X.append([data[c + j] for j in range(l)])
        c += l

    out = actor_forward(params, X)
    for o in out:
        jax.block_until_ready(o)

    ref = reference_forward(params, X)

    for l, o, r in zip(group_lengths, out, ref):
        assert o.shape == (l * OUTPUT_DIM,)
        assert abs(float(jnp.sum(o)) - 1.0) < 5e-3          # softmax sums to 1
        assert float(jnp.max(jnp.abs(o - r))) < 5e-3        # matches reference

    print("KERNEL_OK")
</pallas_src>

<mosaic_0001>
module attributes {stable_mosaic.version = 11 : i64} {
  func.func @_actor_fused_kernel(%arg0: i32, %arg1: memref<2xi32, #tpu.memory_space<smem>>, %arg2: memref<1x8x128xbf16, #tpu.memory_space<vmem>>, %arg3: memref<128x256xbf16, #tpu.memory_space<vmem>>, %arg4: memref<1x256xf32, #tpu.memory_space<vmem>>, %arg5: memref<256x128xbf16, #tpu.memory_space<vmem>>, %arg6: memref<1x128xf32, #tpu.memory_space<vmem>>, %arg7: memref<128x128xbf16, #tpu.memory_space<vmem>>, %arg8: memref<1x128xf32, #tpu.memory_space<vmem>>, %arg9: memref<128x128xbf16, #tpu.memory_space<vmem>>, %arg10: memref<1x128xf32, #tpu.memory_space<vmem>>, %arg11: memref<128x128xbf16, #tpu.memory_space<vmem>>, %arg12: memref<1x128xf32, #tpu.memory_space<vmem>>, %arg13: memref<128x128xbf16, #tpu.memory_space<vmem>>, %arg14: memref<1x128xf32, #tpu.memory_space<vmem>>, %arg15: memref<128x128xbf16, #tpu.memory_space<vmem>>, %arg16: memref<1x128xf32, #tpu.memory_space<vmem>>, %arg17: memref<128x128xbf16, #tpu.memory_space<vmem>>, %arg18: memref<1x128xf32, #tpu.memory_space<vmem>>, %arg19: memref<1x8x128xf32, #tpu.memory_space<vmem>>) attributes {dimension_semantics = [#tpu.dimension_semantics<parallel>], iteration_bounds = array<i64: 2>, scalar_prefetch = 1 : i64, scratch_operands = 0 : i64, tpu.core_type = #tpu.core_type<tc>, window_params = [{transform_indices = @transform_0, window_bounds = array<i64: 1, 8, 128>}, {pipeline_mode = #tpu.pipeline_mode<synchronous>, transform_indices = @transform_1, window_bounds = array<i64: 128, 256>}, {pipeline_mode = #tpu.pipeline_mode<synchronous>, transform_indices = @transform_2, window_bounds = array<i64: 1, 256>}, {pipeline_mode = #tpu.pipeline_mode<synchronous>, transform_indices = @transform_3, window_bounds = array<i64: 256, 128>}, {pipeline_mode = #tpu.pipeline_mode<synchronous>, transform_indices = @transform_4, window_bounds = array<i64: 1, 128>}, {pipeline_mode = #tpu.pipeline_mode<synchronous>, transform_indices = @transform_5, window_bounds = array<i64: 128, 128>}, {pipeline_mode = #tpu.pipeline_mode<synchronous>, transform_indices = @transform_6, window_bounds = array<i64: 1, 128>}, {pipeline_mode = #tpu.pipeline_mode<synchronous>, transform_indices = @transform_7, window_bounds = array<i64: 128, 128>}, {pipeline_mode = #tpu.pipeline_mode<synchronous>, transform_indices = @transform_8, window_bounds = array<i64: 1, 128>}, {pipeline_mode = #tpu.pipeline_mode<synchronous>, transform_indices = @transform_9, window_bounds = array<i64: 128, 128>}, {pipeline_mode = #tpu.pipeline_mode<synchronous>, transform_indices = @transform_10, window_bounds = array<i64: 1, 128>}, {pipeline_mode = #tpu.pipeline_mode<synchronous>, transform_indices = @transform_11, window_bounds = array<i64: 128, 128>}, {pipeline_mode = #tpu.pipeline_mode<synchronous>, transform_indices = @transform_12, window_bounds = array<i64: 1, 128>}, {pipeline_mode = #tpu.pipeline_mode<synchronous>, transform_indices = @transform_13, window_bounds = array<i64: 128, 128>}, {pipeline_mode = #tpu.pipeline_mode<synchronous>, transform_indices = @transform_14, window_bounds = array<i64: 1, 128>}, {pipeline_mode = #tpu.pipeline_mode<synchronous>, transform_indices = @transform_15, window_bounds = array<i64: 128, 128>}, {pipeline_mode = #tpu.pipeline_mode<synchronous>, transform_indices = @transform_16, window_bounds = array<i64: 1, 128>}, {transform_indices = @transform_17, window_bounds = array<i64: 1, 8, 128>}]} {
    %0 = arith.index_cast %arg0 : i32 to index
    %1 = memref.load %arg1[%0] : memref<2xi32, #tpu.memory_space<smem>>
    %c0 = arith.constant 0 : index
    %c0_0 = arith.constant 0 : index
    %c0_1 = arith.constant 0 : index
    %2 = vector.load %arg2[%c0, %c0_0, %c0_1] : memref<1x8x128xbf16, #tpu.memory_space<vmem>>, vector<1x8x128xbf16>
    %3 = vector.shape_cast %2 : vector<1x8x128xbf16> to vector<8x128xbf16>
    %c0_2 = arith.constant 0 : index
    %c0_3 = arith.constant 0 : index
    %4 = vector.load %arg3[%c0_2, %c0_3] : memref<128x256xbf16, #tpu.memory_space<vmem>>, vector<128x256xbf16>
    %c0_4 = arith.constant 0 : index
    %c0_5 = arith.constant 0 : index
    %5 = vector.load %arg4[%c0_4, %c0_5] : memref<1x256xf32, #tpu.memory_space<vmem>>, vector<1x256xf32>
    %cst = arith.constant dense<0.000000e+00> : vector<8x256xf32>
    %6 = tpu.matmul %3, %4, %cst {dimension_numbers = #tpu.dot_dimension_numbers<[1], [0], [0], [1], [0, 0, 1, 1], [], []>} : vector<8x128xbf16>, vector<128x256xbf16>, vector<8x256xf32> -> vector<8x256xf32>
    %7 = vector.broadcast %5 : vector<1x256xf32> to vector<8x256xf32>
    %8 = arith.addf %6, %7 : vector<8x256xf32>
    %cst_6 = arith.constant 0.000000e+00 : f32
    %9 = vector.broadcast %cst_6 : f32 to vector<8x256xf32>
    %10 = arith.cmpf ogt, %8, %9 : vector<8x256xf32>
    %cst_7 = arith.constant 0.00999999977 : f32
    %11 = vector.broadcast %cst_7 : f32 to vector<8x256xf32>
    %12 = arith.mulf %11, %8 : vector<8x256xf32>
    %13 = arith.select %10, %8, %12 : vector<8x256xi1>, vector<8x256xf32>
    %14 = arith.truncf %13 : vector<8x256xf32> to vector<8x256xbf16>
    %c0_8 = arith.constant 0 : index
    %c0_9 = arith.constant 0 : index
    %15 = vector.load %arg5[%c0_8, %c0_9] : memref<256x128xbf16, #tpu.memory_space<vmem>>, vector<256x128xbf16>
    %c0_10 = arith.constant 0 : index
    %c0_11 = arith.constant 0 : index
    %16 = vector.load %arg6[%c0_10, %c0_11] : memref<1x128xf32, #tpu.memory_space<vmem>>, vector<1x128xf32>
    %cst_12 = arith.constant dense<0.000000e+00> : vector<8x128xf32>
    %17 = tpu.matmul %14, %15, %cst_12 {dimension_numbers = #tpu.dot_dimension_numbers<[1], [0], [0], [1], [0, 0, 1, 1], [], []>} : vector<8x256xbf16>, vector<256x128xbf16>, vector<8x128xf32> -> vector<8x128xf32>
    %18 = vector.broadcast %16 : vector<1x128xf32> to vector<8x128xf32>
    %19 = arith.addf %17, %18 : vector<8x128xf32>
    %cst_13 = arith.constant 0.000000e+00 : f32
    %20 = vector.broadcast %cst_13 : f32 to vector<8x128xf32>
    %21 = arith.cmpf ogt, %19, %20 : vector<8x128xf32>
    %cst_14 = arith.constant 0.00999999977 : f32
    %22 = vector.broadcast %cst_14 : f32 to vector<8x128xf32>
    %23 = arith.mulf %22, %19 : vector<8x128xf32>
    %24 = arith.select %21, %19, %23 : vector<8x128xi1>, vector<8x128xf32>
    %25 = arith.truncf %24 : vector<8x128xf32> to vector<8x128xbf16>
    %c0_15 = arith.constant 0 : index
    %c0_16 = arith.constant 0 : index
    %26 = vector.load %arg7[%c0_15, %c0_16] : memref<128x128xbf16, #tpu.memory_space<vmem>>, vector<128x128xbf16>
    %c0_17 = arith.constant 0 : index
    %c0_18 = arith.constant 0 : index
    %27 = vector.load %arg8[%c0_17, %c0_18] : memref<1x128xf32, #tpu.memory_space<vmem>>, vector<1x128xf32>
    %cst_19 = arith.constant dense<0.000000e+00> : vector<8x128xf32>
    %28 = tpu.matmul %25, %26, %cst_19 {dimension_numbers = #tpu.dot_dimension_numbers<[1], [0], [0], [1], [0, 0, 1, 1], [], []>} : vector<8x128xbf16>, vector<128x128xbf16>, vector<8x128xf32> -> vector<8x128xf32>
    %29 = vector.broadcast %27 : vector<1x128xf32> to vector<8x128xf32>
    %30 = arith.addf %28, %29 : vector<8x128xf32>
    %cst_20 = arith.constant 0.000000e+00 : f32
    %31 = vector.broadcast %cst_20 : f32 to vector<8x128xf32>
    %32 = arith.cmpf ogt, %30, %31 : vector<8x128xf32>
    %cst_21 = arith.constant 0.00999999977 : f32
    %33 = vector.broadcast %cst_21 : f32 to vector<8x128xf32>
    %34 = arith.mulf %33, %30 : vector<8x128xf32>
    %35 = arith.select %32, %30, %34 : vector<8x128xi1>, vector<8x128xf32>
    %36 = arith.truncf %35 : vector<8x128xf32> to vector<8x128xbf16>
    %c0_22 = arith.constant 0 : index
    %c0_23 = arith.constant 0 : index
    %37 = vector.load %arg9[%c0_22, %c0_23] : memref<128x128xbf16, #tpu.memory_space<vmem>>, vector<128x128xbf16>
    %c0_24 = arith.constant 0 : index
    %c0_25 = arith.constant 0 : index
    %38 = vector.load %arg10[%c0_24, %c0_25] : memref<1x128xf32, #tpu.memory_space<vmem>>, vector<1x128xf32>
    %cst_26 = arith.constant dense<0.000000e+00> : vector<8x128xf32>
    %39 = tpu.matmul %36, %37, %cst_26 {dimension_numbers = #tpu.dot_dimension_numbers<[1], [0], [0], [1], [0, 0, 1, 1], [], []>} : vector<8x128xbf16>, vector<128x128xbf16>, vector<8x128xf32> -> vector<8x128xf32>
    %40 = vector.broadcast %38 : vector<1x128xf32> to vector<8x128xf32>
    %41 = arith.addf %39, %40 : vector<8x128xf32>
    %cst_27 = arith.constant 0.000000e+00 : f32
    %42 = vector.broadcast %cst_27 : f32 to vector<8x128xf32>
    %43 = arith.cmpf ogt, %41, %42 : vector<8x128xf32>
    %cst_28 = arith.constant 0.00999999977 : f32
    %44 = vector.broadcast %cst_28 : f32 to vector<8x128xf32>
    %45 = arith.mulf %44, %41 : vector<8x128xf32>
    %46 = arith.select %43, %41, %45 : vector<8x128xi1>, vector<8x128xf32>
    %47 = arith.truncf %46 : vector<8x128xf32> to vector<8x128xbf16>
    %c0_29 = arith.constant 0 : index
    %c0_30 = arith.constant 0 : index
    %48 = vector.load %arg11[%c0_29, %c0_30] : memref<128x128xbf16, #tpu.memory_space<vmem>>, vector<128x128xbf16>
    %c0_31 = arith.constant 0 : index
    %c0_32 = arith.constant 0 : index
    %49 = vector.load %arg12[%c0_31, %c0_32] : memref<1x128xf32, #tpu.memory_space<vmem>>, vector<1x128xf32>
    %cst_33 = arith.constant dense<0.000000e+00> : vector<8x128xf32>
    %50 = tpu.matmul %47, %48, %cst_33 {dimension_numbers = #tpu.dot_dimension_numbers<[1], [0], [0], [1], [0, 0, 1, 1], [], []>} : vector<8x128xbf16>, vector<128x128xbf16>, vector<8x128xf32> -> vector<8x128xf32>
    %51 = vector.broadcast %49 : vector<1x128xf32> to vector<8x128xf32>
    %52 = arith.addf %50, %51 : vector<8x128xf32>
    %cst_34 = arith.constant 0.000000e+00 : f32
    %53 = vector.broadcast %cst_34 : f32 to vector<8x128xf32>
    %54 = arith.cmpf ogt, %52, %53 : vector<8x128xf32>
    %cst_35 = arith.constant 0.00999999977 : f32
    %55 = vector.broadcast %cst_35 : f32 to vector<8x128xf32>
    %56 = arith.mulf %55, %52 : vector<8x128xf32>
    %57 = arith.select %54, %52, %56 : vector<8x128xi1>, vector<8x128xf32>
    %58 = arith.truncf %57 : vector<8x128xf32> to vector<8x128xbf16>
    %c0_36 = arith.constant 0 : index
    %c0_37 = arith.constant 0 : index
    %59 = vector.load %arg13[%c0_36, %c0_37] : memref<128x128xbf16, #tpu.memory_space<vmem>>, vector<128x128xbf16>
    %c0_38 = arith.constant 0 : index
    %c0_39 = arith.constant 0 : index
    %60 = vector.load %arg14[%c0_38, %c0_39] : memref<1x128xf32, #tpu.memory_space<vmem>>, vector<1x128xf32>
    %cst_40 = arith.constant dense<0.000000e+00> : vector<8x128xf32>
    %61 = tpu.matmul %58, %59, %cst_40 {dimension_numbers = #tpu.dot_dimension_numbers<[1], [0], [0], [1], [0, 0, 1, 1], [], []>} : vector<8x128xbf16>, vector<128x128xbf16>, vector<8x128xf32> -> vector<8x128xf32>
    %62 = vector.broadcast %60 : vector<1x128xf32> to vector<8x128xf32>
    %63 = arith.addf %61, %62 : vector<8x128xf32>
    %cst_41 = arith.constant 0.000000e+00 : f32
    %64 = vector.broadcast %cst_41 : f32 to vector<8x128xf32>
    %65 = arith.cmpf ogt, %63, %64 : vector<8x128xf32>
    %cst_42 = arith.constant 0.00999999977 : f32
    %66 = vector.broadcast %cst_42 : f32 to vector<8x128xf32>
    %67 = arith.mulf %66, %63 : vector<8x128xf32>
    %68 = arith.select %65, %63, %67 : vector<8x128xi1>, vector<8x128xf32>
    %69 = arith.truncf %68 : vector<8x128xf32> to vector<8x128xbf16>
    %c0_43 = arith.constant 0 : index
    %c0_44 = arith.constant 0 : index
    %70 = vector.load %arg15[%c0_43, %c0_44] : memref<128x128xbf16, #tpu.memory_space<vmem>>, vector<128x128xbf16>
    %c0_45 = arith.constant 0 : index
    %c0_46 = arith.constant 0 : index
    %71 = vector.load %arg16[%c0_45, %c0_46] : memref<1x128xf32, #tpu.memory_space<vmem>>, vector<1x128xf32>
    %cst_47 = arith.constant dense<0.000000e+00> : vector<8x128xf32>
    %72 = tpu.matmul %69, %70, %cst_47 {dimension_numbers = #tpu.dot_dimension_numbers<[1], [0], [0], [1], [0, 0, 1, 1], [], []>} : vector<8x128xbf16>, vector<128x128xbf16>, vector<8x128xf32> -> vector<8x128xf32>
    %73 = vector.broadcast %71 : vector<1x128xf32> to vector<8x128xf32>
    %74 = arith.addf %72, %73 : vector<8x128xf32>
    %cst_48 = arith.constant 0.000000e+00 : f32
    %75 = vector.broadcast %cst_48 : f32 to vector<8x128xf32>
    %76 = arith.cmpf ogt, %74, %75 : vector<8x128xf32>
    %cst_49 = arith.constant 0.00999999977 : f32
    %77 = vector.broadcast %cst_49 : f32 to vector<8x128xf32>
    %78 = arith.mulf %77, %74 : vector<8x128xf32>
    %79 = arith.select %76, %74, %78 : vector<8x128xi1>, vector<8x128xf32>
    %80 = arith.truncf %79 : vector<8x128xf32> to vector<8x128xbf16>
    %c0_50 = arith.constant 0 : index
    %c0_51 = arith.constant 0 : index
    %81 = vector.load %arg17[%c0_50, %c0_51] : memref<128x128xbf16, #tpu.memory_space<vmem>>, vector<128x128xbf16>
    %c0_52 = arith.constant 0 : index
    %c0_53 = arith.constant 0 : index
    %82 = vector.load %arg18[%c0_52, %c0_53] : memref<1x128xf32, #tpu.memory_space<vmem>>, vector<1x128xf32>
    %cst_54 = arith.constant dense<0.000000e+00> : vector<8x128xf32>
    %83 = tpu.matmul %80, %81, %cst_54 {dimension_numbers = #tpu.dot_dimension_numbers<[1], [0], [0], [1], [0, 0, 1, 1], [], []>} : vector<8x128xbf16>, vector<128x128xbf16>, vector<8x128xf32> -> vector<8x128xf32>
    %84 = vector.broadcast %82 : vector<1x128xf32> to vector<8x128xf32>
    %85 = arith.addf %83, %84 : vector<8x128xf32>
    %cst_55 = arith.constant 0.000000e+00 : f32
    %86 = vector.broadcast %cst_55 : f32 to vector<8x128xf32>
    %87 = arith.maximumf %85, %86 : vector<8x128xf32>
    %88 = tpu.iota {dimensions = array<i32: 0>} : vector<8x128xi32>
    %89 = tpu.iota {dimensions = array<i32: 1>} : vector<8x128xi32>
    %90 = vector.broadcast %1 : i32 to vector<8x128xi32>
    %91 = arith.cmpi slt, %88, %90 : vector<8x128xi32>
    %c8_i32 = arith.constant 8 : i32
    %92 = vector.broadcast %c8_i32 : i32 to vector<8x128xi32>
    %93 = arith.cmpi slt, %89, %92 : vector<8x128xi32>
    %94 = arith.andi %91, %93 : vector<8x128xi1>
    %cst_56 = arith.constant -1.000000e+30 : f32
    %95 = vector.broadcast %cst_56 : f32 to vector<8x128xf32>
    %96 = arith.select %94, %87, %95 : vector<8x128xi1>, vector<8x128xf32>
    %97 = vector.shape_cast %96 : vector<8x128xf32> to vector<1x8x128xf32>
    %cst_57 = arith.constant dense<0xFF800000> : vector<1xf32>
    %98 = vector.multi_reduction <maximumf>, %97, %cst_57 [1, 2] : vector<1x8x128xf32> to vector<1xf32>
    %99 = vector.shape_cast %98 : vector<1xf32> to vector<1x1x1xf32>
    %100 = vector.extract %99[0, 0, 0] : f32 from vector<1x1x1xf32>
    %101 = vector.broadcast %100 : f32 to vector<1x1xf32>
    %102 = vector.broadcast %101 : vector<1x1xf32> to vector<8x128xf32>
    %103 = arith.subf %87, %102 : vector<8x128xf32>
    %104 = math.exp %103 : vector<8x128xf32>
    %cst_58 = arith.constant 0.000000e+00 : f32
    %105 = vector.broadcast %cst_58 : f32 to vector<8x128xf32>
    %106 = arith.select %94, %104, %105 : vector<8x128xi1>, vector<8x128xf32>
    %107 = vector.shape_cast %106 : vector<8x128xf32> to vector<1x8x128xf32>
    %cst_59 = arith.constant dense<0.000000e+00> : vector<1xf32>
    %108 = vector.multi_reduction <add>, %107, %cst_59 [1, 2] : vector<1x8x128xf32> to vector<1xf32>
    %109 = vector.shape_cast %108 : vector<1xf32> to vector<1x1x1xf32>
    %110 = vector.extract %109[0, 0, 0] : f32 from vector<1x1x1xf32>
    %111 = vector.broadcast %110 : f32 to vector<1x1xf32>
    %112 = tpu.reciprocal %111 {approx = true} : vector<1x1xf32> -> vector<1x1xf32>
    %113 = vector.broadcast %112 : vector<1x1xf32> to vector<8x128xf32>
    %114 = arith.mulf %106, %113 : vector<8x128xf32>
    %c0_60 = arith.constant 0 : index
    %c0_61 = arith.constant 0 : index
    %c0_62 = arith.constant 0 : index
    %115 = vector.load %arg19[%c0_60, %c0_61, %c0_62] : memref<1x8x128xf32, #tpu.memory_space<vmem>>, vector<1x8x128xf32>
    %116 = vector.shape_cast %115 : vector<1x8x128xf32> to vector<8x128xf32>
    %117 = vector.shape_cast %114 : vector<8x128xf32> to vector<1x8x128xf32>
    tpu.vector_store %arg19[%c0_60, %c0_61, %c0_62], %117 {strides = array<i32>} : memref<1x8x128xf32, #tpu.memory_space<vmem>>, vector<1x8x128xf32>,
    return
  }
  func.func @transform_0(%arg0: i32, %arg1: memref<2xi32, #tpu.memory_space<smem>>) -> (i32, i32, i32) {
    %c0_i32 = arith.constant 0 : i32
    %c0_i32_0 = arith.constant 0 : i32
    %c0_i32_1 = arith.constant 0 : i32
    return %arg0, %c0_i32, %c0_i32_0 : i32, i32, i32
  }
  func.func @transform_1(%arg0: i32, %arg1: memref<2xi32, #tpu.memory_space<smem>>) -> (i32, i32) {
    %c0_i32 = arith.constant 0 : i32
    %c0_i32_0 = arith.constant 0 : i32
    %c0_i32_1 = arith.constant 0 : i32
    return %c0_i32, %c0_i32_0 : i32, i32
  }
  func.func @transform_2(%arg0: i32, %arg1: memref<2xi32, #tpu.memory_space<smem>>) -> (i32, i32) {
    %c0_i32 = arith.constant 0 : i32
    %c0_i32_0 = arith.constant 0 : i32
    %c0_i32_1 = arith.constant 0 : i32
    return %c0_i32, %c0_i32_0 : i32, i32
  }
  func.func @transform_3(%arg0: i32, %arg1: memref<2xi32, #tpu.memory_space<smem>>) -> (i32, i32) {
    %c0_i32 = arith.constant 0 : i32
    %c0_i32_0 = arith.constant 0 : i32
    %c0_i32_1 = arith.constant 0 : i32
    return %c0_i32, %c0_i32_0 : i32, i32
  }
  func.func @transform_4(%arg0: i32, %arg1: memref<2xi32, #tpu.memory_space<smem>>) -> (i32, i32) {
    %c0_i32 = arith.constant 0 : i32
    %c0_i32_0 = arith.constant 0 : i32
    %c0_i32_1 = arith.constant 0 : i32
    return %c0_i32, %c0_i32_0 : i32, i32
  }
  func.func @transform_5(%arg0: i32, %arg1: memref<2xi32, #tpu.memory_space<smem>>) -> (i32, i32) {
    %c0_i32 = arith.constant 0 : i32
    %c0_i32_0 = arith.constant 0 : i32
    %c0_i32_1 = arith.constant 0 : i32
    return %c0_i32, %c0_i32_0 : i32, i32
  }
  func.func @transform_6(%arg0: i32, %arg1: memref<2xi32, #tpu.memory_space<smem>>) -> (i32, i32) {
    %c0_i32 = arith.constant 0 : i32
    %c0_i32_0 = arith.constant 0 : i32
    %c0_i32_1 = arith.constant 0 : i32
    return %c0_i32, %c0_i32_0 : i32, i32
  }
  func.func @transform_7(%arg0: i32, %arg1: memref<2xi32, #tpu.memory_space<smem>>) -> (i32, i32) {
    %c0_i32 = arith.constant 0 : i32
    %c0_i32_0 = arith.constant 0 : i32
    %c0_i32_1 = arith.constant 0 : i32
    return %c0_i32, %c0_i32_0 : i32, i32
  }
  func.func @transform_8(%arg0: i32, %arg1: memref<2xi32, #tpu.memory_space<smem>>) -> (i32, i32) {
    %c0_i32 = arith.constant 0 : i32
    %c0_i32_0 = arith.constant 0 : i32
    %c0_i32_1 = arith.constant 0 : i32
    return %c0_i32, %c0_i32_0 : i32, i32
  }
  func.func @transform_9(%arg0: i32, %arg1: memref<2xi32, #tpu.memory_space<smem>>) -> (i32, i32) {
    %c0_i32 = arith.constant 0 : i32
    %c0_i32_0 = arith.constant 0 : i32
    %c0_i32_1 = arith.constant 0 : i32
    return %c0_i32, %c0_i32_0 : i32, i32
  }
  func.func @transform_10(%arg0: i32, %arg1: memref<2xi32, #tpu.memory_space<smem>>) -> (i32, i32) {
    %c0_i32 = arith.constant 0 : i32
    %c0_i32_0 = arith.constant 0 : i32
    %c0_i32_1 = arith.constant 0 : i32
    return %c0_i32, %c0_i32_0 : i32, i32
  }
  func.func @transform_11(%arg0: i32, %arg1: memref<2xi32, #tpu.memory_space<smem>>) -> (i32, i32) {
    %c0_i32 = arith.constant 0 : i32
    %c0_i32_0 = arith.constant 0 : i32
    %c0_i32_1 = arith.constant 0 : i32
    return %c0_i32, %c0_i32_0 : i32, i32
  }
  func.func @transform_12(%arg0: i32, %arg1: memref<2xi32, #tpu.memory_space<smem>>) -> (i32, i32) {
    %c0_i32 = arith.constant 0 : i32
    %c0_i32_0 = arith.constant 0 : i32
    %c0_i32_1 = arith.constant 0 : i32
    return %c0_i32, %c0_i32_0 : i32, i32
  }
  func.func @transform_13(%arg0: i32, %arg1: memref<2xi32, #tpu.memory_space<smem>>) -> (i32, i32) {
    %c0_i32 = arith.constant 0 : i32
    %c0_i32_0 = arith.constant 0 : i32
    %c0_i32_1 = arith.constant 0 : i32
    return %c0_i32, %c0_i32_0 : i32, i32
  }
  func.func @transform_14(%arg0: i32, %arg1: memref<2xi32, #tpu.memory_space<smem>>) -> (i32, i32) {
    %c0_i32 = arith.constant 0 : i32
    %c0_i32_0 = arith.constant 0 : i32
    %c0_i32_1 = arith.constant 0 : i32
    return %c0_i32, %c0_i32_0 : i32, i32
  }
  func.func @transform_15(%arg0: i32, %arg1: memref<2xi32, #tpu.memory_space<smem>>) -> (i32, i32) {
    %c0_i32 = arith.constant 0 : i32
    %c0_i32_0 = arith.constant 0 : i32
    %c0_i32_1 = arith.constant 0 : i32
    return %c0_i32, %c0_i32_0 : i32, i32
  }
  func.func @transform_16(%arg0: i32, %arg1: memref<2xi32, #tpu.memory_space<smem>>) -> (i32, i32) {
    %c0_i32 = arith.constant 0 : i32
    %c0_i32_0 = arith.constant 0 : i32
    %c0_i32_1 = arith.constant 0 : i32
    return %c0_i32, %c0_i32_0 : i32, i32
  }
  func.func @transform_17(%arg0: i32, %arg1: memref<2xi32, #tpu.memory_space<smem>>) -> (i32, i32, i32) {
    %c0_i32 = arith.constant 0 : i32
    %c0_i32_0 = arith.constant 0 : i32
    %c0_i32_1 = arith.constant 0 : i32
    return %arg0, %c0_i32, %c0_i32_0 : i32, i32, i32
  }
}

</mosaic_0001>

<llo_original>
// kernel: _actor_core.1
$region0: #{_actor_core.1}
  #allocation0 [shape = 'u32[]', space=smem, size = 0x4, offset = 0x4, fixed_abs, tag = 'smem constant byte address 0x4 - core index']
  #allocation1 [shape = 'u32[144,128]{1,0:T(1,128)}', space=vmem, size = 0x12000, scoped, tag = 'internal scratch']
  #allocation2 [shape = 's32[1]{0}', space=sflag, size = 0x4, scoped, tag = 'scoped memory for _actor_core.1']
  #allocation3 [shape = 'u8[512]{0}', space=smem, size = 0x200, scoped, tag = 'prefetched SMEM operand 0']
  %s0 = inlined_call_operand.vmem [shape: s32[2], index: 0, kind: input, shape index: {}]
  %s1 = inlined_call_operand.vmem [shape: bf16[2,8,128], index: 1, kind: input, shape index: {}]
  %s2 = inlined_call_operand.hbm [shape: bf16[128,256], index: 2, kind: input, shape index: {}]
  %s3 = inlined_call_operand.vmem [shape: f32[1,256], index: 3, kind: input, shape index: {}]
  %s4 = inlined_call_operand.hbm [shape: bf16[256,128], index: 4, kind: input, shape index: {}]
  %s5 = inlined_call_operand.vmem [shape: f32[1,128], index: 5, kind: input, shape index: {}]
  %s6 = inlined_call_operand.hbm [shape: bf16[128,128], index: 6, kind: input, shape index: {}]
  %s7 = inlined_call_operand.vmem [shape: f32[1,128], index: 7, kind: input, shape index: {}]
  %s8 = inlined_call_operand.hbm [shape: bf16[128,128], index: 8, kind: input, shape index: {}]
  %s9 = inlined_call_operand.vmem [shape: f32[1,128], index: 9, kind: input, shape index: {}]
  %s10 = inlined_call_operand.hbm [shape: bf16[128,128], index: 10, kind: input, shape index: {}]
  %s11 = inlined_call_operand.vmem [shape: f32[1,128], index: 11, kind: input, shape index: {}]
  %s12 = inlined_call_operand.hbm [shape: bf16[128,128], index: 12, kind: input, shape index: {}]
  %s13 = inlined_call_operand.vmem [shape: f32[1,128], index: 13, kind: input, shape index: {}]
  %s14 = inlined_call_operand.hbm [shape: bf16[128,128], index: 14, kind: input, shape index: {}]
  %s15 = inlined_call_operand.vmem [shape: f32[1,128], index: 15, kind: input, shape index: {}]
  %s16 = inlined_call_operand.hbm [shape: bf16[128,128], index: 16, kind: input, shape index: {}]
  %s17 = inlined_call_operand.vmem [shape: f32[1,128], index: 17, kind: input, shape index: {}]
  %s18 = inlined_call_operand.hbm [shape: f32[2,8,128], index: 18, kind: output, shape index: {}]
  %s19 = sld [smem:[#allocation0]]
  $region133: #{_actor_core.1} parent=0
    _
  %s21 = ssub.s32 1, %s19
  %s22 = scalar_select 0, %s21, %s19
  %s23 = sshll.u32 %s0, 4
  %s24 = int_to_ptr.vmem [resolvable:$true] %s23
  %26 = dma.vmem_to_smem %s24, 16, [#allocation3], [#allocation2]
  %27 = dma.done [#allocation2], 16
  %28 = sfence
  $region1: #{_actor_core.1} parent=0
    #allocation4 [shape = 'u8[65536]{0}', space=vmem, size = 0x10000, scoped, tag = 'input window, operand 2, single buffered']
    #allocation5 [shape = 's32[2]{0}', space=sflag, size = 0x8, scoped, tag = 'scoped memory for _actor_core.1']
    #allocation6 [shape = 's32[2]{0}', space=sflag, size = 0x8, scoped, tag = 'scoped memory for _actor_core.1']
    #allocation7 [shape = 'u8[65536]{0}', space=vmem, size = 0x10000, scoped, tag = 'input window, operand 4, single buffered']
    #allocation8 [shape = 's32[1]{0}', space=sflag, size = 0x4, scoped, tag = 'scoped memory for _actor_core.1']
    #allocation9 [shape = 'u8[32768]{0}', space=vmem, size = 0x8000, scoped, tag = 'input window, operand 6, single buffered']
    #allocation10 [shape = 'u8[32768]{0}', space=vmem, size = 0x8000, scoped, tag = 'input window, operand 8, single buffered']
    #allocation11 [shape = 's32[1]{0}', space=sflag, size = 0x4, scoped, tag = 'scoped memory for _actor_core.1']
    #allocation12 [shape = 'u8[32768]{0}', space=vmem, size = 0x8000, scoped, tag = 'input window, operand 10, single buffered']
    #allocation13 [shape = 'u8[32768]{0}', space=vmem, size = 0x8000, scoped, tag = 'input window, operand 12, single buffered']
    #allocation14 [shape = 's32[1]{0}', space=sflag, size = 0x4, scoped, tag = 'scoped memory for _actor_core.1']
    #allocation15 [shape = 'u8[32768]{0}', space=vmem, size = 0x8000, scoped, tag = 'input window, operand 14, single buffered']
    #allocation16 [shape = 'u8[32768]{0}', space=vmem, size = 0x8000, scoped, tag = 'input window, operand 16, single buffered']
    #allocation17 [shape = 's32[1]{0}', space=sflag, size = 0x4, scoped, tag = 'scoped memory for _actor_core.1']
    #allocation18 [shape = 'u8[8192]{0}', space=vmem, size = 0x2000, scoped, tag = 'output window, operand 0']
    %29 = vsyncpa [#allocation5], 0
    %30 = vsyncpa [#allocation8], 0
    %31 = vsyncpa [#allocation11], 0
    %32 = vsyncpa [#allocation14], 0
    %33 = vsyncpa [#allocation17], 0
    %34 = vsyncpa [#allocation6], 0
    %s35 = scalar_lea.sflag [#allocation6], 1
    %36 = vsyncpa %s35, 0
    loop: start=0, step=1, limit=4
    $region2: #{_actor_core.1} parent=1 // loop_pre_header
      _
    $region3: #{_actor_core.1} parent=1 // loop_header
      %s38 = sphi 0, %s42
      %p39 = scmp.ge.s32.totalorder %s38, 4
      %s48 = sphi 0, %s50
      %s51 = sphi 0, %s48
      %s52 = sphi 0, %s51
      %s68 = sphi 0, %s52
      %s72 = sphi 0, %s72
      %s74 = sphi 0, %s72
      %s75 = sphi 0, %s74
      %s89 = sphi 0, %s75
      %s93 = sphi 0, %s93
      %s95 = sphi 0, %s93
      %s96 = sphi 0, %s95
      %s110 = sphi 0, %s96
      %s114 = sphi 0, %s114
      %s116 = sphi 0, %s114
      %s117 = sphi 0, %s116
      %s131 = sphi 0, %s117
      %s135 = sphi 0, %s135
      %s137 = sphi 0, %s135
      %s138 = sphi 0, %s137
      %s152 = sphi 0, %s138
      %s156 = sphi 0, %s156
      %s158 = sphi 0, %s156
      %s159 = sphi 0, %s158
      %s173 = sphi 0, %s159
      %s177 = sphi 0, %s177
      %s179 = sphi 0, %s177
      %s180 = sphi 0, %s179
      %s194 = sphi 0, %s180
      %s198 = sphi 0, %s198
      %s200 = sphi 0, %s198
      %s201 = sphi 0, %s200
      %s215 = sphi 0, %s201
      %s219 = sphi 0, %s219
      %s221 = sphi 0, %s219
      %s222 = sphi 0, %s221
      %s236 = sphi 0, %s222
      %s240 = sphi 0, %s240
      %s242 = sphi 0, %s240
      %s243 = sphi 0, %s242
      %s257 = sphi 0, %s243
      %s261 = sphi 0, %s261
      %s263 = sphi 0, %s261
      %s264 = sphi 0, %s263
      %s278 = sphi 0, %s264
      %s282 = sphi 0, %s282
      %s284 = sphi 0, %s282
      %s285 = sphi 0, %s284
      %s299 = sphi 0, %s285
      %s303 = sphi 0, %s303
      %s305 = sphi 0, %s303
      %s306 = sphi 0, %s305
      %s320 = sphi 0, %s306
      %s324 = sphi 0, %s324
      %s326 = sphi 0, %s324
      %s327 = sphi 0, %s326
      %s341 = sphi 0, %s327
      %s345 = sphi 0, %s345
      %s347 = sphi 0, %s345
      %s348 = sphi 0, %s347
      %s362 = sphi 0, %s348
      %s366 = sphi 0, %s366
      %s368 = sphi 0, %s366
      %s369 = sphi 0, %s368
      %s383 = sphi 0, %s369
      %s387 = sphi 0, %s387
      %s389 = sphi 0, %s387
      %s390 = sphi 0, %s389
      %s404 = sphi 0, %s390
      %s410 = sphi 0, %s412
      %s413 = sphi 0, %s410
      %s414 = sphi 0, %s413
      %s430 = sphi 0, %s414
    $region4: #{_actor_core.1} parent=1 // loop_header_branch
      %41 = sbr.rel (%p39) target = $region8
    $region5: #{_actor_core.1} parent=1 // loop_body
      %s43 = ssub.s32 %s38, 1
      %s44 = ssub.s32 %s38, 2
      %s45 = sadd.s32 %s38, 1
      %s46 = ssub.s32 %s38, %s45
      %p47 = scmp.eq.s32.totalorder %s46, 0
      %s49 = sadd.s32 %s48, 1
      %s50 = scalar_select %p47, %s48, %s49
      %p53 = pneg %p47
      %p54 = scmp.eq.s32.totalorder %s38, 1
      %p55 = por %p53, %p54
      %p56 = scmp.ne.s32.totalorder %s48, %s51
      %p57 = scmp.eq.s32.totalorder %s38, 0
      %p58 = por %p56, %p57
      %p59 = scmp.ne.s32.totalorder %s48, %s51
      %p60 = scmp.eq.s32.totalorder %s43, 1
      %p61 = por %p59, %p60
      %p62 = scmp.ne.s32.totalorder %s51, %s52
      %p63 = scmp.eq.s32.totalorder %s43, 0
      %p64 = por %p62, %p63
      %p65 = scmp.ne.s32.totalorder %s51, %s52
      %p66 = scmp.eq.s32.totalorder %s44, 1
      %p67 = por %p65, %p66
      %p69 = scmp.ne.s32.totalorder %s52, %s68
      %p70 = scmp.eq.s32.totalorder %s44, 0
      %p71 = por %p69, %p70
      %s73 = sadd.s32 %s72, 1
      %p76 = scmp.eq.s32.totalorder %s38, 1
      %p77 = scmp.ne.s32.totalorder %s72, %s74
      %p78 = scmp.eq.s32.totalorder %s38, 0
      %p79 = por %p77, %p78
      %p80 = scmp.ne.s32.totalorder %s72, %s74
      %p81 = scmp.eq.s32.totalorder %s43, 1
      %p82 = por %p80, %p81
      %p83 = scmp.ne.s32.totalorder %s74, %s75
      %p84 = scmp.eq.s32.totalorder %s43, 0
      %p85 = por %p83, %p84
      %p86 = scmp.ne.s32.totalorder %s74, %s75
      %p87 = scmp.eq.s32.totalorder %s44, 1
      %p88 = por %p86, %p87
      %p90 = scmp.ne.s32.totalorder %s75, %s89
      %p91 = scmp.eq.s32.totalorder %s44, 0
      %p92 = por %p90, %p91
      %s94 = sadd.s32 %s93, 1
      %p97 = scmp.eq.s32.totalorder %s38, 1
      %p98 = scmp.ne.s32.totalorder %s93, %s95
      %p99 = scmp.eq.s32.totalorder %s38, 0
      %p100 = por %p98, %p99
      %p101 = scmp.ne.s32.totalorder %s93, %s95
      %p102 = scmp.eq.s32.totalorder %s43, 1
      %p103 = por %p101, %p102
      %p104 = scmp.ne.s32.totalorder %s95, %s96
      %p105 = scmp.eq.s32.totalorder %s43, 0
      %p106 = por %p104, %p105
      %p107 = scmp.ne.s32.totalorder %s95, %s96
      %p108 = scmp.eq.s32.totalorder %s44, 1
      %p109 = por %p107, %p108
      %p111 = scmp.ne.s32.totalorder %s96, %s110
      %p112 = scmp.eq.s32.totalorder %s44, 0
      %p113 = por %p111, %p112
      %s115 = sadd.s32 %s114, 1
      %p118 = scmp.eq.s32.totalorder %s38, 1
      %p119 = scmp.ne.s32.totalorder %s114, %s116
      %p120 = scmp.eq.s32.totalorder %s38, 0
      %p121 = por %p119, %p120
      %p122 = scmp.ne.s32.totalorder %s114, %s116
      %p123 = scmp.eq.s32.totalorder %s43, 1
      %p124 = por %p122, %p123
      %p125 = scmp.ne.s32.totalorder %s116, %s117
      %p126 = scmp.eq.s32.totalorder %s43, 0
      %p127 = por %p125, %p126
      %p128 = scmp.ne.s32.totalorder %s116, %s117
      %p129 = scmp.eq.s32.totalorder %s44, 1
      %p130 = por %p128, %p129
      %p132 = scmp.ne.s32.totalorder %s117, %s131
      %p133 = scmp.eq.s32.totalorder %s44, 0
      %p134 = por %p132, %p133
      %s136 = sadd.s32 %s135, 1
      %p139 = scmp.eq.s32.totalorder %s38, 1
      %p140 = scmp.ne.s32.totalorder %s135, %s137
      %p141 = scmp.eq.s32.totalorder %s38, 0
      %p142 = por %p140, %p141
      %p143 = scmp.ne.s32.totalorder %s135, %s137
      %p144 = scmp.eq.s32.totalorder %s43, 1
      %p145 = por %p143, %p144
      %p146 = scmp.ne.s32.totalorder %s137, %s138
      %p147 = scmp.eq.s32.totalorder %s43, 0
      %p148 = por %p146, %p147
      %p149 = scmp.ne.s32.totalorder %s137, %s138
      %p150 = scmp.eq.s32.totalorder %s44, 1
      %p151 = por %p149, %p150
      %p153 = scmp.ne.s32.totalorder %s138, %s152
      %p154 = scmp.eq.s32.totalorder %s44, 0
      %p155 = por %p153, %p154
      %s157 = sadd.s32 %s156, 1
      %p160 = scmp.eq.s32.totalorder %s38, 1
      %p161 = scmp.ne.s32.totalorder %s156, %s158
      %p162 = scmp.eq.s32.totalorder %s38, 0
      %p163 = por %p161, %p162
      %p164 = scmp.ne.s32.totalorder %s156, %s158
      %p165 = scmp.eq.s32.totalorder %s43, 1
      %p166 = por %p164, %p165
      %p167 = scmp.ne.s32.totalorder %s158, %s159
      %p168 = scmp.eq.s32.totalorder %s43, 0
      %p169 = por %p167, %p168
      %p170 = scmp.ne.s32.totalorder %s158, %s159
      %p171 = scmp.eq.s32.totalorder %s44, 1
      %p172 = por %p170, %p171
      %p174 = scmp.ne.s32.totalorder %s159, %s173
      %p175 = scmp.eq.s32.totalorder %s44, 0
      %p176 = por %p174, %p175
      %s178 = sadd.s32 %s177, 1
      %p181 = scmp.eq.s32.totalorder %s38, 1
      %p182 = scmp.ne.s32.totalorder %s177, %s179
      %p183 = scmp.eq.s32.totalorder %s38, 0
      %p184 = por %p182, %p183
      %p185 = scmp.ne.s32.totalorder %s177, %s179
      %p186 = scmp.eq.s32.totalorder %s43, 1
      %p187 = por %p185, %p186
      %p188 = scmp.ne.s32.totalorder %s179, %s180
      %p189 = scmp.eq.s32.totalorder %s43, 0
      %p190 = por %p188, %p189
      %p191 = scmp.ne.s32.totalorder %s179, %s180
      %p192 = scmp.eq.s32.totalorder %s44, 1
      %p193 = por %p191, %p192
      %p195 = scmp.ne.s32.totalorder %s180, %s194
      %p196 = scmp.eq.s32.totalorder %s44, 0
      %p197 = por %p195, %p196
      %s199 = sadd.s32 %s198, 1
      %p202 = scmp.eq.s32.totalorder %s38, 1
      %p203 = scmp.ne.s32.totalorder %s198, %s200
      %p204 = scmp.eq.s32.totalorder %s38, 0
      %p205 = por %p203, %p204
      %p206 = scmp.ne.s32.totalorder %s198, %s200
      %p207 = scmp.eq.s32.totalorder %s43, 1
      %p208 = por %p206, %p207
      %p209 = scmp.ne.s32.totalorder %s200, %s201
      %p210 = scmp.eq.s32.totalorder %s43, 0
      %p211 = por %p209, %p210
      %p212 = scmp.ne.s32.totalorder %s200, %s201
      %p213 = scmp.eq.s32.totalorder %s44, 1
      %p214 = por %p212, %p213
      %p216 = scmp.ne.s32.totalorder %s201, %s215
      %p217 = scmp.eq.s32.totalorder %s44, 0
      %p218 = por %p216, %p217
      %s220 = sadd.s32 %s219, 1
      %p223 = scmp.eq.s32.totalorder %s38, 1
      %p224 = scmp.ne.s32.totalorder %s219, %s221
      %p225 = scmp.eq.s32.totalorder %s38, 0
      %p226 = por %p224, %p225
      %p227 = scmp.ne.s32.totalorder %s219, %s221
      %p228 = scmp.eq.s32.totalorder %s43, 1
      %p229 = por %p227, %p228
      %p230 = scmp.ne.s32.totalorder %s221, %s222
      %p231 = scmp.eq.s32.totalorder %s43, 0
      %p232 = por %p230, %p231
      %p233 = scmp.ne.s32.totalorder %s221, %s222
      %p234 = scmp.eq.s32.totalorder %s44, 1
      %p235 = por %p233, %p234
      %p237 = scmp.ne.s32.totalorder %s222, %s236
      %p238 = scmp.eq.s32.totalorder %s44, 0
      %p239 = por %p237, %p238
      %s241 = sadd.s32 %s240, 1
      %p244 = scmp.eq.s32.totalorder %s38, 1
      %p245 = scmp.ne.s32.totalorder %s240, %s242
      %p246 = scmp.eq.s32.totalorder %s38, 0
      %p247 = por %p245, %p246
      %p248 = scmp.ne.s32.totalorder %s240, %s242
      %p249 = scmp.eq.s32.totalorder %s43, 1
      %p250 = por %p248, %p249
      %p251 = scmp.ne.s32.totalorder %s242, %s243
      %p252 = scmp.eq.s32.totalorder %s43, 0
      %p253 = por %p251, %p252
      %p254 = scmp.ne.s32.totalorder %s242, %s243
      %p255 = scmp.eq.s32.totalorder %s44, 1
      %p256 = por %p254, %p255
      %p258 = scmp.ne.s32.totalorder %s243, %s257
      %p259 = scmp.eq.s32.totalorder %s44, 0
      %p260 = por %p258, %p259
      %s262 = sadd.s32 %s261, 1
      %p265 = scmp.eq.s32.totalorder %s38, 1
      %p266 = scmp.ne.s32.totalorder %s261, %s263
      %p267 = scmp.eq.s32.totalorder %s38, 0
      %p268 = por %p266, %p267
      %p269 = scmp.ne.s32.totalorder %s261, %s263
      %p270 = scmp.eq.s32.totalorder %s43, 1
      %p271 = por %p269, %p270
      %p272 = scmp.ne.s32.totalorder %s263, %s264
      %p273 = scmp.eq.s32.totalorder %s43, 0
      %p274 = por %p272, %p273
      %p275 = scmp.ne.s32.totalorder %s263, %s264
      %p276 = scmp.eq.s32.totalorder %s44, 1
      %p277 = por %p275, %p276
      %p279 = scmp.ne.s32.totalorder %s264, %s278
      %p280 = scmp.eq.s32.totalorder %s44, 0
      %p281 = por %p279, %p280
      %s283 = sadd.s32 %s282, 1
      %p286 = scmp.eq.s32.totalorder %s38, 1
      %p287 = scmp.ne.s32.totalorder %s282, %s284
      %p288 = scmp.eq.s32.totalorder %s38, 0
      %p289 = por %p287, %p288
      %p290 = scmp.ne.s32.totalorder %s282, %s284
      %p291 = scmp.eq.s32.totalorder %s43, 1
      %p292 = por %p290, %p291
      %p293 = scmp.ne.s32.totalorder %s284, %s285
      %p294 = scmp.eq.s32.totalorder %s43, 0
      %p295 = por %p293, %p294
      %p296 = scmp.ne.s32.totalorder %s284, %s285
      %p297 = scmp.eq.s32.totalorder %s44, 1
      %p298 = por %p296, %p297
      %p300 = scmp.ne.s32.totalorder %s285, %s299
      %p301 = scmp.eq.s32.totalorder %s44, 0
      %p302 = por %p300, %p301
      %s304 = sadd.s32 %s303, 1
      %p307 = scmp.eq.s32.totalorder %s38, 1
      %p308 = scmp.ne.s32.totalorder %s303, %s305
      %p309 = scmp.eq.s32.totalorder %s38, 0
      %p310 = por %p308, %p309
      %p311 = scmp.ne.s32.totalorder %s303, %s305
      %p312 = scmp.eq.s32.totalorder %s43, 1
      %p313 = por %p311, %p312
      %p314 = scmp.ne.s32.totalorder %s305, %s306
      %p315 = scmp.eq.s32.totalorder %s43, 0
      %p316 = por %p314, %p315
      %p317 = scmp.ne.s32.totalorder %s305, %s306
      %p318 = scmp.eq.s32.totalorder %s44, 1
      %p319 = por %p317, %p318
      %p321 = scmp.ne.s32.totalorder %s306, %s320
      %p322 = scmp.eq.s32.totalorder %s44, 0
      %p323 = por %p321, %p322
      %s325 = sadd.s32 %s324, 1
      %p328 = scmp.eq.s32.totalorder %s38, 1
      %p329 = scmp.ne.s32.totalorder %s324, %s326
      %p330 = scmp.eq.s32.totalorder %s38, 0
      %p331 = por %p329, %p330
      %p332 = scmp.ne.s32.totalorder %s324, %s326
      %p333 = scmp.eq.s32.totalorder %s43, 1
      %p334 = por %p332, %p333
      %p335 = scmp.ne.s32.totalorder %s326, %s327
      %p336 = scmp.eq.s32.totalorder %s43, 0
      %p337 = por %p335, %p336
      %p338 = scmp.ne.s32.totalorder %s326, %s327
      %p339 = scmp.eq.s32.totalorder %s44, 1
      %p340 = por %p338, %p339
      %p342 = scmp.ne.s32.totalorder %s327, %s341
      %p343 = scmp.eq.s32.totalorder %s44, 0
      %p344 = por %p342, %p343
      %s346 = sadd.s32 %s345, 1
      %p349 = scmp.eq.s32.totalorder %s38, 1
      %p350 = scmp.ne.s32.totalorder %s345, %s347
      %p351 = scmp.eq.s32.totalorder %s38, 0
      %p352 = por %p350, %p351
      %p353 = scmp.ne.s32.totalorder %s345, %s347
      %p354 = scmp.eq.s32.totalorder %s43, 1
      %p355 = por %p353, %p354
      %p356 = scmp.ne.s32.totalorder %s347, %s348
      %p357 = scmp.eq.s32.totalorder %s43, 0
      %p358 = por %p356, %p357
      %p359 = scmp.ne.s32.totalorder %s347, %s348
      %p360 = scmp.eq.s32.totalorder %s44, 1
      %p361 = por %p359, %p360
      %p363 = scmp.ne.s32.totalorder %s348, %s362
      %p364 = scmp.eq.s32.totalorder %s44, 0
      %p365 = por %p363, %p364
      %s367 = sadd.s32 %s366, 1
      %p370 = scmp.eq.s32.totalorder %s38, 1
      %p371 = scmp.ne.s32.totalorder %s366, %s368
      %p372 = scmp.eq.s32.totalorder %s38, 0
      %p373 = por %p371, %p372
      %p374 = scmp.ne.s32.totalorder %s366, %s368
      %p375 = scmp.eq.s32.totalorder %s43, 1
      %p376 = por %p374, %p375
      %p377 = scmp.ne.s32.totalorder %s368, %s369
      %p378 = scmp.eq.s32.totalorder %s43, 0
      %p379 = por %p377, %p378
      %p380 = scmp.ne.s32.totalorder %s368, %s369
      %p381 = scmp.eq.s32.totalorder %s44, 1
      %p382 = por %p380, %p381
      %p384 = scmp.ne.s32.totalorder %s369, %s383
      %p385 = scmp.eq.s32.totalorder %s44, 0
      %p386 = por %p384, %p385
      %s388 = sadd.s32 %s387, 1
      %p391 = scmp.eq.s32.totalorder %s38, 1
      %p392 = scmp.ne.s32.totalorder %s387, %s389
      %p393 = scmp.eq.s32.totalorder %s38, 0
      %p394 = por %p392, %p393
      %p395 = scmp.ne.s32.totalorder %s387, %s389
      %p396 = scmp.eq.s32.totalorder %s43, 1
      %p397 = por %p395, %p396
      %p398 = scmp.ne.s32.totalorder %s389, %s390
      %p399 = scmp.eq.s32.totalorder %s43, 0
      %p400 = por %p398, %p399
      %p401 = scmp.ne.s32.totalorder %s389, %s390
      %p402 = scmp.eq.s32.totalorder %s44, 1
      %p403 = por %p401, %p402
      %p405 = scmp.ne.s32.totalorder %s390, %s404
      %p406 = scmp.eq.s32.totalorder %s44, 0
      %p407 = por %p405, %p406
      %s408 = ssub.s32 %s38, %s45
      %p409 = scmp.eq.s32.totalorder %s408, 0
      %s411 = sadd.s32 %s410, 1
      %s412 = scalar_select %p409, %s410, %s411
      %p415 = pneg %p409
      %p416 = scmp.eq.s32.totalorder %s38, 1
      %p417 = por %p415, %p416
      %p418 = scmp.ne.s32.totalorder %s410, %s413
      %p419 = scmp.eq.s32.totalorder %s38, 0
      %p420 = por %p418, %p419
      %p421 = scmp.ne.s32.totalorder %s410, %s413
      %p422 = scmp.eq.s32.totalorder %s43, 1
      %p423 = por %p421, %p422
      %p424 = scmp.ne.s32.totalorder %s413, %s414
      %p425 = scmp.eq.s32.totalorder %s43, 0
      %p426 = por %p424, %p425
      %p427 = scmp.ne.s32.totalorder %s413, %s414
      %p428 = scmp.eq.s32.totalorder %s44, 1
      %p429 = por %p427, %p428
      %p431 = scmp.ne.s32.totalorder %s414, %s430
      %p432 = scmp.eq.s32.totalorder %s44, 0
      %p433 = por %p431, %p432
      %p434 = scmp.le.s32.totalorder 1, %s38
      %p435 = scmp.lt.s32.totalorder %s38, 3
      %p436 = pnand %p434, %p435
      %p437 = pneg %p436
      // Predicated region
      $region9: #{_actor_core.1} parent=5 // pred_check
        _
      $region10: #{_actor_core.1} parent=5 // pred_check_branch
        %439 = sbr.rel (%p436) target = $region12
      $region11: #{_actor_core.1} parent=5 // pred_region
        %s440 = ssub.s32 %s38, 1
        // Predicated region
        $region13: #{_actor_core.1} parent=11 // pred_check
          %p441 = pneg %p85
        $region14: #{_actor_core.1} parent=11 // pred_check_branch
          %443 = sbr.rel (%p441) target = $region16
        $region15: #{_actor_core.1} parent=11 // pred_region
          %s445 = ssub.s32 2048, 2048
          %446 = vsyncadd [#allocation5], %s445
          %s447 = sshll.u32 [#allocation4], 4
          %s448 = int_to_ptr.vmem [resolvable:$true] %s447
          %453 = dma.hbm_to_vmem [thread:$0]  %s2, 2048, %s448, [#allocation5], 128, 128, 8
        $region16: #{_actor_core.1} parent=11 // pred_fallthru
          _
        // Predicated region
        $region17: #{_actor_core.1} parent=11 // pred_check
          %p454 = pneg %p106
        $region18: #{_actor_core.1} parent=11 // pred_check_branch
          %456 = sbr.rel (%p454) target = $region20
        $region19: #{_actor_core.1} parent=11 // pred_region
          _
        $region20: #{_actor_core.1} parent=11 // pred_fallthru
          _
        // Predicated region
        $region21: #{_actor_core.1} parent=11 // pred_check
          %p457 = pneg %p127
        $region22: #{_actor_core.1} parent=11 // pred_check_branch
          %459 = sbr.rel (%p457) target = $region24
        $region23: #{_actor_core.1} parent=11 // pred_region
          %s461 = ssub.s32 2048, 2048
          %462 = vsyncadd [#allocation8], %s461
          %s463 = sshll.u32 [#allocation7], 4
          %s464 = int_to_ptr.vmem [resolvable:$true] %s463
          %469 = dma.hbm_to_vmem [thread:$0]  %s4, 2048, %s464, [#allocation8], 64, 64, 4
        $region24: #{_actor_core.1} parent=11 // pred_fallthru
          _
        // Predicated region
        $region25: #{_actor_core.1} parent=11 // pred_check
          %p470 = pneg %p148
        $region26: #{_actor_core.1} parent=11 // pred_check_branch
          %472 = sbr.rel (%p470) target = $region28
        $region27: #{_actor_core.1} parent=11 // pred_region
          _
        $region28: #{_actor_core.1} parent=11 // pred_fallthru
          _
        // Predicated region
        $region29: #{_actor_core.1} parent=11 // pred_check
          %p473 = pneg %p169
        $region30: #{_actor_core.1} parent=11 // pred_check_branch
          %475 = sbr.rel (%p473) target = $region32
        $region31: #{_actor_core.1} parent=11 // pred_region
          %s477 = ssub.s32 1024, 1024
          %478 = vsyncadd [#allocation8], %s477
          %s479 = sshll.u32 [#allocation9], 4
          %s480 = int_to_ptr.vmem [resolvable:$true] %s479
          %485 = dma.hbm_to_vmem [thread:$0]  %s6, 1024, %s480, [#allocation8], 64, 64, 4
        $region32: #{_actor_core.1} parent=11 // pred_fallthru
          _
        // Predicated region
        $region33: #{_actor_core.1} parent=11 // pred_check
          %p486 = pneg %p190
        $region34: #{_actor_core.1} parent=11 // pred_check_branch
          %488 = sbr.rel (%p486) target = $region36
        $region35: #{_actor_core.1} parent=11 // pred_region
          _
        $region36: #{_actor_core.1} parent=11 // pred_fallthru
          _
        // Predicated region
        $region37: #{_actor_core.1} parent=11 // pred_check
          %p489 = pneg %p211
        $region38: #{_actor_core.1} parent=11 // pred_check_branch
          %491 = sbr.rel (%p489) target = $region40
        $region39: #{_actor_core.1} parent=11 // pred_region
          %s493 = ssub.s32 1024, 1024
          %494 = vsyncadd [#allocation11], %s493
          %s495 = sshll.u32 [#allocation10], 4
          %s496 = int_to_ptr.vmem [resolvable:$true] %s495
          %501 = dma.hbm_to_vmem [thread:$0]  %s8, 1024, %s496, [#allocation11], 64, 64, 4
        $region40: #{_actor_core.1} parent=11 // pred_fallthru
          _
        // Predicated region
        $region41: #{_actor_core.1} parent=11 // pred_check
          %p502 = pneg %p232
        $region42: #{_actor_core.1} parent=11 // pred_check_branch
          %504 = sbr.rel (%p502) target = $region44
        $region43: #{_actor_core.1} parent=11 // pred_region
          _
        $region44: #{_actor_core.1} parent=11 // pred_fallthru
          _
        // Predicated region
        $region45: #{_actor_core.1} parent=11 // pred_check
          %p505 = pneg %p253
        $region46: #{_actor_core.1} parent=11 // pred_check_branch
          %507 = sbr.rel (%p505) target = $region48
        $region47: #{_actor_core.1} parent=11 // pred_region
          %s509 = ssub.s32 1024, 1024
          %510 = vsyncadd [#allocation11], %s509
          %s511 = sshll.u32 [#allocation12], 4
          %s512 = int_to_ptr.vmem [resolvable:$true] %s511
          %517 = dma.hbm_to_vmem [thread:$0]  %s10, 1024, %s512, [#allocation11], 64, 64, 4
        $region48: #{_actor_core.1} parent=11 // pred_fallthru
          _
        // Predicated region
        $region49: #{_actor_core.1} parent=11 // pred_check
          %p518 = pneg %p274
        $region50: #{_actor_core.1} parent=11 // pred_check_branch
          %520 = sbr.rel (%p518) target = $region52
        $region51: #{_actor_core.1} parent=11 // pred_region
          _
        $region52: #{_actor_core.1} parent=11 // pred_fallthru
          _
        // Predicated region
        $region53: #{_actor_core.1} parent=11 // pred_check
          %p521 = pneg %p295
        $region54: #{_actor_core.1} parent=11 // pred_check_branch
          %523 = sbr.rel (%p521) target = $region56
        $region55: #{_actor_core.1} parent=11 // pred_region
          %s525 = ssub.s32 1024, 1024
          %526 = vsyncadd [#allocation14], %s525
          %s527 = sshll.u32 [#allocation13], 4
          %s528 = int_to_ptr.vmem [resolvable:$true] %s527
          %533 = dma.hbm_to_vmem [thread:$0]  %s12, 1024, %s528, [#allocation14], 64, 64, 4
        $region56: #{_actor_core.1} parent=11 // pred_fallthru
          _
        // Predicated region
        $region57: #{_actor_core.1} parent=11 // pred_check
          %p534 = pneg %p316
        $region58: #{_actor_core.1} parent=11 // pred_check_branch
          %536 = sbr.rel (%p534) target = $region60
        $region59: #{_actor_core.1} parent=11 // pred_region
          _
        $region60: #{_actor_core.1} parent=11 // pred_fallthru
          _
        // Predicated region
        $region61: #{_actor_core.1} parent=11 // pred_check
          %p537 = pneg %p337
        $region62: #{_actor_core.1} parent=11 // pred_check_branch
          %539 = sbr.rel (%p537) target = $region64
        $region63: #{_actor_core.1} parent=11 // pred_region
          %s541 = ssub.s32 1024, 1024
          %542 = vsyncadd [#allocation14], %s541
          %s543 = sshll.u32 [#allocation15], 4
          %s544 = int_to_ptr.vmem [resolvable:$true] %s543
          %549 = dma.hbm_to_vmem [thread:$0]  %s14, 1024, %s544, [#allocation14], 64, 64, 4
        $region64: #{_actor_core.1} parent=11 // pred_fallthru
          _
        // Predicated region
        $region65: #{_actor_core.1} parent=11 // pred_check
          %p550 = pneg %p358
        $region66: #{_actor_core.1} parent=11 // pred_check_branch
          %552 = sbr.rel (%p550) target = $region68
        $region67: #{_actor_core.1} parent=11 // pred_region
          _
        $region68: #{_actor_core.1} parent=11 // pred_fallthru
          _
        // Predicated region
        $region69: #{_actor_core.1} parent=11 // pred_check
          %p553 = pneg %p379
        $region70: #{_actor_core.1} parent=11 // pred_check_branch
          %555 = sbr.rel (%p553) target = $region72
        $region71: #{_actor_core.1} parent=11 // pred_region
          %s557 = ssub.s32 1024, 1024
          %558 = vsyncadd [#allocation17], %s557
          %s559 = sshll.u32 [#allocation16], 4
          %s560 = int_to_ptr.vmem [resolvable:$true] %s559
          %565 = dma.hbm_to_vmem [thread:$0]  %s16, 1024, %s560, [#allocation17], 64, 64, 4
        $region72: #{_actor_core.1} parent=11 // pred_fallthru
          _
        // Predicated region
        $region73: #{_actor_core.1} parent=11 // pred_check
          %p566 = pneg %p400
        $region74: #{_actor_core.1} parent=11 // pred_check_branch
          %568 = sbr.rel (%p566) target = $region76
        $region75: #{_actor_core.1} parent=11 // pred_region
          _
        $region76: #{_actor_core.1} parent=11 // pred_fallthru
          _
      $region12: #{_actor_core.1} parent=5 // pred_fallthru
        _
      %p569 = scmp.lt.s32.totalorder %s38, 2
      // Predicated region
      $region77: #{_actor_core.1} parent=5 // pred_check
        %p570 = pneg %p569
      $region78: #{_actor_core.1} parent=5 // pred_check_branch
        %572 = sbr.rel (%p570) target = $region80
      $region79: #{_actor_core.1} parent=5 // pred_region
        // Predicated region
        $region81: #{_actor_core.1} parent=79 // pred_check
          %p573 = pneg %p58
        $region82: #{_actor_core.1} parent=79 // pred_check_branch
          %575 = sbr.rel (%p573) target = $region84
        $region83: #{_actor_core.1} parent=79 // pred_region
          %p576 = scmp.lt.s32.totalorder %s38, 1
          %s577 = scalar_select %p576, %s38, 1
          %s578 = smul.addr %s577, 4
          %s579 = scalar_lea.vmem %s1, %s578
        $region84: #{_actor_core.1} parent=79 // pred_fallthru
          _
      $region80: #{_actor_core.1} parent=5 // pred_fallthru
        _
      %p580 = scmp.le.s32.totalorder 1, %s38
      %p581 = scmp.lt.s32.totalorder %s38, 3
      %p582 = pnand %p580, %p581
      %p583 = pneg %p582
      // Predicated region
      $region85: #{_actor_core.1} parent=5 // pred_check
        _
      $region86: #{_actor_core.1} parent=5 // pred_check_branch
        %585 = sbr.rel (%p582) target = $region88
      $region87: #{_actor_core.1} parent=5 // pred_region
        %s586 = ssub.s32 %s38, 1
        // Predicated region
        $region89: #{_actor_core.1} parent=87 // pred_check
          %p587 = pneg %p85
        $region90: #{_actor_core.1} parent=87 // pred_check_branch
          %589 = sbr.rel (%p587) target = $region92
        $region91: #{_actor_core.1} parent=87 // pred_region
          %590 = dma.done [#allocation5], 2048
        $region92: #{_actor_core.1} parent=87 // pred_fallthru
          _
        // Predicated region
        $region93: #{_actor_core.1} parent=87 // pred_check
          %p591 = pneg %p127
        $region94: #{_actor_core.1} parent=87 // pred_check_branch
          %593 = sbr.rel (%p591) target = $region96
        $region95: #{_actor_core.1} parent=87 // pred_region
          %594 = dma.done [#allocation8], 2048
        $region96: #{_actor_core.1} parent=87 // pred_fallthru
          _
        // Predicated region
        $region97: #{_actor_core.1} parent=87 // pred_check
          %p595 = pneg %p169
        $region98: #{_actor_core.1} parent=87 // pred_check_branch
          %597 = sbr.rel (%p595) target = $region100
        $region99: #{_actor_core.1} parent=87 // pred_region
          %598 = dma.done [#allocation8], 1024
        $region100: #{_actor_core.1} parent=87 // pred_fallthru
          _
        // Predicated region
        $region101: #{_actor_core.1} parent=87 // pred_check
          %p599 = pneg %p211
        $region102: #{_actor_core.1} parent=87 // pred_check_branch
          %601 = sbr.rel (%p599) target = $region104
        $region103: #{_actor_core.1} parent=87 // pred_region
          %602 = dma.done [#allocation11], 1024
        $region104: #{_actor_core.1} parent=87 // pred_fallthru
          _
        // Predicated region
        $region105: #{_actor_core.1} parent=87 // pred_check
          %p603 = pneg %p253
        $region106: #{_actor_core.1} parent=87 // pred_check_branch
          %605 = sbr.rel (%p603) target = $region108
        $region107: #{_actor_core.1} parent=87 // pred_region
          %606 = dma.done [#allocation11], 1024
        $region108: #{_actor_core.1} parent=87 // pred_fallthru
          _
        // Predicated region
        $region109: #{_actor_core.1} parent=87 // pred_check
          %p607 = pneg %p295
        $region110: #{_actor_core.1} parent=87 // pred_check_branch
          %609 = sbr.rel (%p607) target = $region112
        $region111: #{_actor_core.1} parent=87 // pred_region
          %610 = dma.done [#allocation14], 1024
        $region112: #{_actor_core.1} parent=87 // pred_fallthru
          _
        // Predicated region
        $region113: #{_actor_core.1} parent=87 // pred_check
          %p611 = pneg %p337
        $region114: #{_actor_core.1} parent=87 // pred_check_branch
          %613 = sbr.rel (%p611) target = $region116
        $region115: #{_actor_core.1} parent=87 // pred_region
          %614 = dma.done [#allocation14], 1024
        $region116: #{_actor_core.1} parent=87 // pred_fallthru
          _
        // Predicated region
        $region117: #{_actor_core.1} parent=87 // pred_check
          %p615 = pneg %p379
        $region118: #{_actor_core.1} parent=87 // pred_check_branch
          %617 = sbr.rel (%p615) target = $region120
        $region119: #{_actor_core.1} parent=87 // pred_region
          %618 = dma.done [#allocation17], 1024
        $region120: #{_actor_core.1} parent=87 // pred_fallthru
          _
        %p619 = scmp.lt.s32.totalorder %s43, 1
        %s620 = scalar_select %p619, %s43, 1
        %s621 = smul.addr %s620, 4
        %s622 = scalar_lea.vmem %s1, %s621
        %p623 = pneg %p64
        %p624 = pneg %p61
        %p625 = pneg %p85
        %p626 = pneg %p82
        %p627 = pneg %p106
        %p628 = pneg %p103
        %p629 = pneg %p127
        %p630 = pneg %p124
        %p631 = pneg %p148
        %p632 = pneg %p145
        %p633 = pneg %p169
        %p634 = pneg %p166
        %p635 = pneg %p190
        %p636 = pneg %p187
        %p637 = pneg %p211
        %p638 = pneg %p208
        %p639 = pneg %p232
        %p640 = pneg %p229
        %p641 = pneg %p253
        %p642 = pneg %p250
        %p643 = pneg %p274
        %p644 = pneg %p271
        %p645 = pneg %p295
        %p646 = pneg %p292
        %p647 = pneg %p316
        %p648 = pneg %p313
        %p649 = pneg %p337
        %p650 = pneg %p334
        %p651 = pneg %p358
        %p652 = pneg %p355
        %p653 = pneg %p379
        %p654 = pneg %p376
        %p655 = pneg %p400
        %p656 = pneg %p397
        %p657 = pneg %p426
        %p658 = pneg %p423
        %s659 = sand.u32 %s413, 1
        %s660 = scalar_lea.sflag [#allocation6], %s659
        %s661 = sand.u32 %s413, 1
        %s662 = smul.addr %s661, 8
        %s663 = scalar_lea.vmem [#allocation18], %s662
        %p664 = scmp.lt.s32.totalorder %s43, 1
        %s665 = scalar_select %p664, %s43, 1
        %s666 = smul.addr %s665, 4
        %s667 = scalar_lea.vmem %s1, %s666
        %s669 = sld [smem:[#allocation3 + %s43]]
        %v670 = vld [vmem:[%s667] sm:$0xf]
        %v671 = vld [vmem:[#allocation4] sm:$0xff]
        %v672 = vld [vmem:[#allocation4 + $0x8] sm:$0xff]
        %v673 = vld [vmem:[#allocation4 + $0x10] sm:$0xff]
        %v674 = vld [vmem:[#allocation4 + $0x18] sm:$0xff]
        %v675 = vld [vmem:[#allocation4 + $0x20] sm:$0xff]
        %v676 = vld [vmem:[#allocation4 + $0x28] sm:$0xff]
        %v677 = vld [vmem:[#allocation4 + $0x30] sm:$0xff]
        %v678 = vld [vmem:[#allocation4 + $0x38] sm:$0xff]
        %v679 = vld [vmem:[#allocation4 + $0x40] sm:$0xff]
        %v680 = vld [vmem:[#allocation4 + $0x48] sm:$0xff]
        %v681 = vld [vmem:[#allocation4 + $0x50] sm:$0xff]
        %v682 = vld [vmem:[#allocation4 + $0x58] sm:$0xff]
        %v683 = vld [vmem:[#allocation4 + $0x60] sm:$0xff]
        %v684 = vld [vmem:[#allocation4 + $0x68] sm:$0xff]
        %v685 = vld [vmem:[#allocation4 + $0x70] sm:$0xff]
        %v686 = vld [vmem:[#allocation4 + $0x78] sm:$0xff]
        %v687 = vld [vmem:[%s3] sm:$0x3]
        %v689 = vlaneseq
        %v690 = vshrl.u32 %v689, 7
        %v691 = vsub.s32 0, %v690
        %v692 = vrot.slane %v687, %v691
        %v693 = vlaneseq
        %v694 = vshrl.u32 %v693, 7
        %v695 = vsub.s32 1, %v694
        %v696 = vrot.slane %v687, %v695
        %v715 = vunpack.c.l.b16 %v671
        %v716 = vunpack.c.h.b16 %v671
        %v717 = vunpack.c.l.b16 %v672
        %v718 = vunpack.c.h.b16 %v672
        %v719 = vunpack.c.l.b16 %v673
        %v720 = vunpack.c.h.b16 %v673
        %v721 = vunpack.c.l.b16 %v674
        %v722 = vunpack.c.h.b16 %v674
        %v723 = vunpack.c.l.b16 %v675
        %v724 = vunpack.c.h.b16 %v675
        %v725 = vunpack.c.l.b16 %v676
        %v726 = vunpack.c.h.b16 %v676
        %v727 = vunpack.c.l.b16 %v677
        %v728 = vunpack.c.h.b16 %v677
        %v729 = vunpack.c.l.b16 %v678
        %v730 = vunpack.c.h.b16 %v678
        %v731 = vunpack.c.l.b16 %v679
        %v732 = vunpack.c.h.b16 %v679
        %v733 = vunpack.c.l.b16 %v680
        %v734 = vunpack.c.h.b16 %v680
        %v735 = vunpack.c.l.b16 %v681
        %v736 = vunpack.c.h.b16 %v681
        %v737 = vunpack.c.l.b16 %v682
        %v738 = vunpack.c.h.b16 %v682
        %v739 = vunpack.c.l.b16 %v683
        %v740 = vunpack.c.h.b16 %v683
        %v741 = vunpack.c.l.b16 %v684
        %v742 = vunpack.c.h.b16 %v684
        %v743 = vunpack.c.l.b16 %v685
        %v744 = vunpack.c.h.b16 %v685
        %v745 = vunpack.c.l.b16 %v686
        %v746 = vunpack.c.h.b16 %v686
        %v747 = vpack.c.b16 %v717, %v715
        %v748 = vpack.c.b16 %v718, %v716
        %v749 = vpack.c.b16 %v721, %v719
        %v750 = vpack.c.b16 %v722, %v720
        %v751 = vpack.c.b16 %v725, %v723
        %v752 = vpack.c.b16 %v726, %v724
        %v753 = vpack.c.b16 %v729, %v727
        %v754 = vpack.c.b16 %v730, %v728
        %v755 = vpack.c.b16 %v733, %v731
        %v756 = vpack.c.b16 %v734, %v732
        %v757 = vpack.c.b16 %v737, %v735
        %v758 = vpack.c.b16 %v738, %v736
        %v759 = vpack.c.b16 %v741, %v739
        %v760 = vpack.c.b16 %v742, %v740
        %v761 = vpack.c.b16 %v745, %v743
        %v762 = vpack.c.b16 %v746, %v744
        %779 = vmatprep.subr.bf16.mxu0 %v748
        %780 = vmatpush1.bf16.msra.mxu0 %v747
        %781 = vmatprep.subr.bf16.mxu0 %v750
        %782 = vmatpush1.bf16.msra.mxu0 %v749
        %783 = vmatprep.subr.bf16.mxu0 %v752
        %784 = vmatpush1.bf16.msra.mxu0 %v751
        %785 = vmatprep.subr.bf16.mxu0 %v754
        %786 = vmatpush1.bf16.msra.mxu0 %v753
        %787 = vmatprep.subr.bf16.mxu0 %v756
        %788 = vmatpush1.bf16.msra.mxu0 %v755
        %789 = vmatprep.subr.bf16.mxu0 %v758
        %790 = vmatpush1.bf16.msra.mxu0 %v757
        %791 = vmatprep.subr.bf16.mxu0 %v760
        %792 = vmatpush1.bf16.msra.mxu0 %v759
        %793 = vmatprep.subr.bf16.mxu0 %v762
        %794 = vmatpush1.bf16.msra.mxu0 %v761
        %795 = vmatprep.subr.bf16.mxu0 0
        %796 = vmatpush1.bf16.msra.mxu0 0
        %797 = vmatprep.subr.bf16.mxu0 0
        %798 = vmatpush1.bf16.msra.mxu0 0
        %799 = vmatprep.subr.bf16.mxu0 0
        %800 = vmatpush1.bf16.msra.mxu0 0
        %801 = vmatprep.subr.bf16.mxu0 0
        %802 = vmatpush1.bf16.msra.mxu0 0
        %803 = vmatprep.subr.bf16.mxu0 0
        %804 = vmatpush1.bf16.msra.mxu0 0
        %805 = vmatprep.subr.bf16.mxu0 0
        %806 = vmatpush1.bf16.msra.mxu0 0
        %807 = vmatprep.subr.bf16.mxu0 0
        %808 = vmatpush1.bf16.msra.mxu0 0
        %809 = vmatprep.subr.bf16.mxu0 0
        %810 = vmatpush1.bf16.msra.mxu0 0
        %811 = vmatprep.mubr.bf16.mxu0 0
        %812 = vmatmul.mubr.bf16.gmra.mrb[0].mxu0 %v670
        %v813 = vpop.f32.mrb[0].mxu0
        %v814 = vadd.f32 %v692, %v813
        %v815 = vpop.f32.mrb[0].mxu0
        %v816 = vadd.f32 %v696, %v815
        %v817 = vpop.f32.mrb[0].mxu0
        %v818 = vpop.f32.mrb[0].mxu0
        %819 = vdwg.mxu0
        %vm820 = vcmp.gt.f32.partialorder %v814, 0.0
        %vm821 = vcmp.gt.f32.partialorder %v816, 0.0
        %v822 = vmul.f32 %v814, 0.01
        %v823 = vmul.f32 %v816, 0.01
        %v824 = vsel %vm820, %v814, %v822
        %v825 = vsel %vm821, %v816, %v823
        %v826 = vpack.c.bf16 %v824, %v824
        %v827 = vpack.c.bf16 %v825, %v825
        %v828 = vld [vmem:[#allocation7] sm:$0xf]
        %v829 = vld [vmem:[#allocation7 + $0x4] sm:$0xf]
        %v830 = vld [vmem:[#allocation7 + $0x8] sm:$0xf]
        %v831 = vld [vmem:[#allocation7 + $0xc] sm:$0xf]
        %v832 = vld [vmem:[#allocation7 + $0x10] sm:$0xf]
        %v833 = vld [vmem:[#allocation7 + $0x14] sm:$0xf]
        %v834 = vld [vmem:[#allocation7 + $0x18] sm:$0xf]
        %v835 = vld [vmem:[#allocation7 + $0x1c] sm:$0xf]
        %v836 = vld [vmem:[#allocation7 + $0x20] sm:$0xf]
        %v837 = vld [vmem:[#allocation7 + $0x24] sm:$0xf]
        %v838 = vld [vmem:[#allocation7 + $0x28] sm:$0xf]
        %v839 = vld [vmem:[#allocation7 + $0x2c] sm:$0xf]
        %v840 = vld [vmem:[#allocation7 + $0x30] sm:$0xf]
        %v841 = vld [vmem:[#allocation7 + $0x34] sm:$0xf]
        %v842 = vld [vmem:[#allocation7 + $0x38] sm:$0xf]
        %v843 = vld [vmem:[#allocation7 + $0x3c] sm:$0xf]
        %v844 = vld [vmem:[#allocation7 + $0x40] sm:$0xf]
        %v845 = vld [vmem:[#allocation7 + $0x44] sm:$0xf]
        %v846 = vld [vmem:[#allocation7 + $0x48] sm:$0xf]
        %v847 = vld [vmem:[#allocation7 + $0x4c] sm:$0xf]
        %v848 = vld [vmem:[#allocation7 + $0x50] sm:$0xf]
        %v849 = vld [vmem:[#allocation7 + $0x54] sm:$0xf]
        %v850 = vld [vmem:[#allocation7 + $0x58] sm:$0xf]
        %v851 = vld [vmem:[#allocation7 + $0x5c] sm:$0xf]
        %v852 = vld [vmem:[#allocation7 + $0x60] sm:$0xf]
        %v853 = vld [vmem:[#allocation7 + $0x64] sm:$0xf]
        %v854 = vld [vmem:[#allocation7 + $0x68] sm:$0xf]
        %v855 = vld [vmem:[#allocation7 + $0x6c] sm:$0xf]
        %v856 = vld [vmem:[#allocation7 + $0x70] sm:$0xf]
        %v857 = vld [vmem:[#allocation7 + $0x74] sm:$0xf]
        %v858 = vld [vmem:[#allocation7 + $0x78] sm:$0xf]
        %v859 = vld [vmem:[#allocation7 + $0x7c] sm:$0xf]
        %v860 = vld [vmem:[%s5] sm:$0x1]
        %v862 = vlaneseq
        %v863 = vshrl.u32 %v862, 7
        %v864 = vsub.s32 0, %v863
        %v865 = vrot.slane %v860, %v864
        %v899 = vunpack.c.l.b16 %v828
        %v900 = vunpack.c.l.b16 %v829
        %v901 = vunpack.c.l.b16 %v830
        %v902 = vunpack.c.l.b16 %v831
        %v903 = vunpack.c.l.b16 %v832
        %v904 = vunpack.c.l.b16 %v833
        %v905 = vunpack.c.l.b16 %v834
        %v906 = vunpack.c.l.b16 %v835
        %v907 = vunpack.c.l.b16 %v836
        %v908 = vunpack.c.l.b16 %v837
        %v909 = vunpack.c.l.b16 %v838
        %v910 = vunpack.c.l.b16 %v839
        %v911 = vunpack.c.l.b16 %v840
        %v912 = vunpack.c.l.b16 %v841
        %v913 = vunpack.c.l.b16 %v842
        %v914 = vunpack.c.l.b16 %v843
        %v915 = vunpack.c.l.b16 %v844
        %v916 = vunpack.c.l.b16 %v845
        %v917 = vunpack.c.l.b16 %v846
        %v918 = vunpack.c.l.b16 %v847
        %v919 = vunpack.c.l.b16 %v848
        %v920 = vunpack.c.l.b16 %v849
        %v921 = vunpack.c.l.b16 %v850
        %v922 = vunpack.c.l.b16 %v851
        %v923 = vunpack.c.l.b16 %v852
        %v924 = vunpack.c.l.b16 %v853
        %v925 = vunpack.c.l.b16 %v854
        %v926 = vunpack.c.l.b16 %v855
        %v927 = vunpack.c.l.b16 %v856
        %v928 = vunpack.c.l.b16 %v857
        %v929 = vunpack.c.l.b16 %v858
        %v930 = vunpack.c.l.b16 %v859
        %v931 = vpack.c.b16 %v900, %v899
        %v932 = vpack.c.b16 %v902, %v901
        %v933 = vpack.c.b16 %v904, %v903
        %v934 = vpack.c.b16 %v906, %v905
        %v935 = vpack.c.b16 %v908, %v907
        %v936 = vpack.c.b16 %v910, %v909
        %v937 = vpack.c.b16 %v912, %v911
        %v938 = vpack.c.b16 %v914, %v913
        %v939 = vpack.c.b16 %v916, %v915
        %v940 = vpack.c.b16 %v918, %v917
        %v941 = vpack.c.b16 %v920, %v919
        %v942 = vpack.c.b16 %v922, %v921
        %v943 = vpack.c.b16 %v924, %v923
        %v944 = vpack.c.b16 %v926, %v925
        %v945 = vpack.c.b16 %v928, %v927
        %v946 = vpack.c.b16 %v930, %v929
        %963 = vmatprep.subr.bf16.mxu0 0
        %964 = vmatpush1.bf16.msra.mxu0 %v931
        %965 = vmatprep.subr.bf16.mxu0 0
        %966 = vmatpush1.bf16.msra.mxu0 %v932
        %967 = vmatprep.subr.bf16.mxu0 0
        %968 = vmatpush1.bf16.msra.mxu0 %v933
        %969 = vmatprep.subr.bf16.mxu0 0
        %970 = vmatpush1.bf16.msra.mxu0 %v934
        %971 = vmatprep.subr.bf16.mxu0 0
        %972 = vmatpush1.bf16.msra.mxu0 %v935
        %973 = vmatprep.subr.bf16.mxu0 0
        %974 = vmatpush1.bf16.msra.mxu0 %v936
        %975 = vmatprep.subr.bf16.mxu0 0
        %976 = vmatpush1.bf16.msra.mxu0 %v937
        %977 = vmatprep.subr.bf16.mxu0 0
        %978 = vmatpush1.bf16.msra.mxu0 %v938
        %979 = vmatprep.subr.bf16.mxu0 0
        %980 = vmatpush1.bf16.msra.mxu0 %v939
        %981 = vmatprep.subr.bf16.mxu0 0
        %982 = vmatpush1.bf16.msra.mxu0 %v940
        %983 = vmatprep.subr.bf16.mxu0 0
        %984 = vmatpush1.bf16.msra.mxu0 %v941
        %985 = vmatprep.subr.bf16.mxu0 0
        %986 = vmatpush1.bf16.msra.mxu0 %v942
        %987 = vmatprep.subr.bf16.mxu0 0
        %988 = vmatpush1.bf16.msra.mxu0 %v943
        %989 = vmatprep.subr.bf16.mxu0 0
        %990 = vmatpush1.bf16.msra.mxu0 %v944
        %991 = vmatprep.subr.bf16.mxu0 0
        %992 = vmatpush1.bf16.msra.mxu0 %v945
        %993 = vmatprep.subr.bf16.mxu0 0
        %994 = vmatpush1.bf16.msra.mxu0 %v946
        %995 = vmatprep.mubr.bf16.mxu0 %v827
        %996 = vmatmul.mubr.bf16.gmra.mrb[0].mxu0 %v826
        %v997 = vpop.f32.mrb[0].mxu0
        %v998 = vadd.f32 %v865, %v997
        %v999 = vpop.f32.mrb[0].mxu0
        %v1000 = vpop.f32.mrb[0].mxu0
        %v1001 = vpop.f32.mrb[0].mxu0
        %1002 = vdwg.mxu0
        %vm1003 = vcmp.gt.f32.partialorder %v998, 0.0
        %v1004 = vmul.f32 %v998, 0.01
        %v1005 = vsel %vm1003, %v998, %v1004
        %v1006 = vpack.c.bf16 %v1005, %v1005
        %v1007 = vld [vmem:[#allocation9] sm:$0xf]
        %v1008 = vld [vmem:[#allocation9 + $0x4] sm:$0xf]
        %v1009 = vld [vmem:[#allocation9 + $0x8] sm:$0xf]
        %v1010 = vld [vmem:[#allocation9 + $0xc] sm:$0xf]
        %v1011 = vld [vmem:[#allocation9 + $0x10] sm:$0xf]
        %v1012 = vld [vmem:[#allocation9 + $0x14] sm:$0xf]
        %v1013 = vld [vmem:[#allocation9 + $0x18] sm:$0xf]
        %v1014 = vld [vmem:[#allocation9 + $0x1c] sm:$0xf]
        %v1015 = vld [vmem:[#allocation9 + $0x20] sm:$0xf]
        %v1016 = vld [vmem:[#allocation9 + $0x24] sm:$0xf]
        %v1017 = vld [vmem:[#allocation9 + $0x28] sm:$0xf]
        %v1018 = vld [vmem:[#allocation9 + $0x2c] sm:$0xf]
        %v1019 = vld [vmem:[#allocation9 + $0x30] sm:$0xf]
        %v1020 = vld [vmem:[#allocation9 + $0x34] sm:$0xf]
        %v1021 = vld [vmem:[#allocation9 + $0x38] sm:$0xf]
        %v1022 = vld [vmem:[#allocation9 + $0x3c] sm:$0xf]
        %v1023 = vld [vmem:[%s7] sm:$0x1]
        %v1025 = vlaneseq
        %v1026 = vshrl.u32 %v1025, 7
        %v1027 = vsub.s32 0, %v1026
        %v1028 = vrot.slane %v1023, %v1027
        %v1046 = vunpack.c.l.b16 %v1007
        %v1047 = vunpack.c.l.b16 %v1008
        %v1048 = vunpack.c.l.b16 %v1009
        %v1049 = vunpack.c.l.b16 %v1010
        %v1050 = vunpack.c.l.b16 %v1011
        %v1051 = vunpack.c.l.b16 %v1012
        %v1052 = vunpack.c.l.b16 %v1013
        %v1053 = vunpack.c.l.b16 %v1014
        %v1054 = vunpack.c.l.b16 %v1015
        %v1055 = vunpack.c.l.b16 %v1016
        %v1056 = vunpack.c.l.b16 %v1017
        %v1057 = vunpack.c.l.b16 %v1018
        %v1058 = vunpack.c.l.b16 %v1019
        %v1059 = vunpack.c.l.b16 %v1020
        %v1060 = vunpack.c.l.b16 %v1021
        %v1061 = vunpack.c.l.b16 %v1022
        %v1062 = vpack.c.b16 %v1047, %v1046
        %v1063 = vpack.c.b16 %v1049, %v1048
        %v1064 = vpack.c.b16 %v1051, %v1050
        %v1065 = vpack.c.b16 %v1053, %v1052
        %v1066 = vpack.c.b16 %v1055, %v1054
        %v1067 = vpack.c.b16 %v1057, %v1056
        %v1068 = vpack.c.b16 %v1059, %v1058
        %v1069 = vpack.c.b16 %v1061, %v1060
        %1078 = vmatprep.subr.bf16.mxu0 0
        %1079 = vmatpush1.bf16.msra.mxu0 %v1062
        %1080 = vmatprep.subr.bf16.mxu0 0
        %1081 = vmatpush1.bf16.msra.mxu0 %v1063
        %1082 = vmatprep.subr.bf16.mxu0 0
        %1083 = vmatpush1.bf16.msra.mxu0 %v1064
        %1084 = vmatprep.subr.bf16.mxu0 0
        %1085 = vmatpush1.bf16.msra.mxu0 %v1065
        %1086 = vmatprep.subr.bf16.mxu0 0
        %1087 = vmatpush1.bf16.msra.mxu0 %v1066
        %1088 = vmatprep.subr.bf16.mxu0 0
        %1089 = vmatpush1.bf16.msra.mxu0 %v1067
        %1090 = vmatprep.subr.bf16.mxu0 0
        %1091 = vmatpush1.bf16.msra.mxu0 %v1068
        %1092 = vmatprep.subr.bf16.mxu0 0
        %1093 = vmatpush1.bf16.msra.mxu0 %v1069
        %1094 = vmatprep.subr.bf16.mxu0 0
        %1095 = vmatpush1.bf16.msra.mxu0 0
        %1096 = vmatprep.subr.bf16.mxu0 0
        %1097 = vmatpush1.bf16.msra.mxu0 0
        %1098 = vmatprep.subr.bf16.mxu0 0
        %1099 = vmatpush1.bf16.msra.mxu0 0
        %1100 = vmatprep.subr.bf16.mxu0 0
        %1101 = vmatpush1.bf16.msra.mxu0 0
        %1102 = vmatprep.subr.bf16.mxu0 0
        %1103 = vmatpush1.bf16.msra.mxu0 0
        %1104 = vmatprep.subr.bf16.mxu0 0
        %1105 = vmatpush1.bf16.msra.mxu0 0
        %1106 = vmatprep.subr.bf16.mxu0 0
        %1107 = vmatpush1.bf16.msra.mxu0 0
        %1108 = vmatprep.subr.bf16.mxu0 0
        %1109 = vmatpush1.bf16.msra.mxu0 0
        %1110 = vmatprep.mubr.bf16.mxu0 0
        %1111 = vmatmul.mubr.bf16.gmra.mrb[0].mxu0 %v1006
        %v1112 = vpop.f32.mrb[0].mxu0
        %v1113 = vadd.f32 %v1028, %v1112
        %v1114 = vpop.f32.mrb[0].mxu0
        %v1115 = vpop.f32.mrb[0].mxu0
        %v1116 = vpop.f32.mrb[0].mxu0
        %1117 = vdwg.mxu0
        %vm1118 = vcmp.gt.f32.partialorder %v1113, 0.0
        %v1119 = vmul.f32 %v1113, 0.01
        %v1120 = vsel %vm1118, %v1113, %v1119
        %v1121 = vpack.c.bf16 %v1120, %v1120
        %v1122 = vld [vmem:[#allocation10] sm:$0xf]
        %v1123 = vld [vmem:[#allocation10 + $0x4] sm:$0xf]
        %v1124 = vld [vmem:[#allocation10 + $0x8] sm:$0xf]
        %v1125 = vld [vmem:[#allocation10 + $0xc] sm:$0xf]
        %v1126 = vld [vmem:[#allocation10 + $0x10] sm:$0xf]
        %v1127 = vld [vmem:[#allocation10 + $0x14] sm:$0xf]
        %v1128 = vld [vmem:[#allocation10 + $0x18] sm:$0xf]
        %v1129 = vld [vmem:[#allocation10 + $0x1c] sm:$0xf]
        %v1130 = vld [vmem:[#allocation10 + $0x20] sm:$0xf]
        %v1131 = vld [vmem:[#allocation10 + $0x24] sm:$0xf]
        %v1132 = vld [vmem:[#allocation10 + $0x28] sm:$0xf]
        %v1133 = vld [vmem:[#allocation10 + $0x2c] sm:$0xf]
        %v1134 = vld [vmem:[#allocation10 + $0x30] sm:$0xf]
        %v1135 = vld [vmem:[#allocation10 + $0x34] sm:$0xf]
        %v1136 = vld [vmem:[#allocation10 + $0x38] sm:$0xf]
        %v1137 = vld [vmem:[#allocation10 + $0x3c] sm:$0xf]
        %v1138 = vld [vmem:[%s9] sm:$0x1]
        %v1140 = vlaneseq
        %v1141 = vshrl.u32 %v1140, 7
        %v1142 = vsub.s32 0, %v1141
        %v1143 = vrot.slane %v1138, %v1142
        %v1161 = vunpack.c.l.b16 %v1122
        %v1162 = vunpack.c.l.b16 %v1123
        %v1163 = vunpack.c.l.b16 %v1124
        %v1164 = vunpack.c.l.b16 %v1125
        %v1165 = vunpack.c.l.b16 %v1126
        %v1166 = vunpack.c.l.b16 %v1127
        %v1167 = vunpack.c.l.b16 %v1128
        %v1168 = vunpack.c.l.b16 %v1129
        %v1169 = vunpack.c.l.b16 %v1130
        %v1170 = vunpack.c.l.b16 %v1131
        %v1171 = vunpack.c.l.b16 %v1132
        %v1172 = vunpack.c.l.b16 %v1133
        %v1173 = vunpack.c.l.b16 %v1134
        %v1174 = vunpack.c.l.b16 %v1135
        %v1175 = vunpack.c.l.b16 %v1136
        %v1176 = vunpack.c.l.b16 %v1137
        %v1177 = vpack.c.b16 %v1162, %v1161
        %v1178 = vpack.c.b16 %v1164, %v1163
        %v1179 = vpack.c.b16 %v1166, %v1165
        %v1180 = vpack.c.b16 %v1168, %v1167
        %v1181 = vpack.c.b16 %v1170, %v1169
        %v1182 = vpack.c.b16 %v1172, %v1171
        %v1183 = vpack.c.b16 %v1174, %v1173
        %v1184 = vpack.c.b16 %v1176, %v1175
        %1193 = vmatprep.subr.bf16.mxu0 0
        %1194 = vmatpush1.bf16.msra.mxu0 %v1177
        %1195 = vmatprep.subr.bf16.mxu0 0
        %1196 = vmatpush1.bf16.msra.mxu0 %v1178
        %1197 = vmatprep.subr.bf16.mxu0 0
        %1198 = vmatpush1.bf16.msra.mxu0 %v1179
        %1199 = vmatprep.subr.bf16.mxu0 0
        %1200 = vmatpush1.bf16.msra.mxu0 %v1180
        %1201 = vmatprep.subr.bf16.mxu0 0
        %1202 = vmatpush1.bf16.msra.mxu0 %v1181
        %1203 = vmatprep.subr.bf16.mxu0 0
        %1204 = vmatpush1.bf16.msra.mxu0 %v1182
        %1205 = vmatprep.subr.bf16.mxu0 0
        %1206 = vmatpush1.bf16.msra.mxu0 %v1183
        %1207 = vmatprep.subr.bf16.mxu0 0
        %1208 = vmatpush1.bf16.msra.mxu0 %v1184
        %1209 = vmatprep.subr.bf16.mxu0 0
        %1210 = vmatpush1.bf16.msra.mxu0 0
        %1211 = vmatprep.subr.bf16.mxu0 0
        %1212 = vmatpush1.bf16.msra.mxu0 0
        %1213 = vmatprep.subr.bf16.mxu0 0
        %1214 = vmatpush1.bf16.msra.mxu0 0
        %1215 = vmatprep.subr.bf16.mxu0 0
        %1216 = vmatpush1.bf16.msra.mxu0 0
        %1217 = vmatprep.subr.bf16.mxu0 0
        %1218 = vmatpush1.bf16.msra.mxu0 0
        %1219 = vmatprep.subr.bf16.mxu0 0
        %1220 = vmatpush1.bf16.msra.mxu0 0
        %1221 = vmatprep.subr.bf16.mxu0 0
        %1222 = vmatpush1.bf16.msra.mxu0 0
        %1223 = vmatprep.subr.bf16.mxu0 0
        %1224 = vmatpush1.bf16.msra.mxu0 0
        %1225 = vmatprep.mubr.bf16.mxu0 0
        %1226 = vmatmul.mubr.bf16.gmra.mrb[0].mxu0 %v1121
        %v1227 = vpop.f32.mrb[0].mxu0
        %v1228 = vadd.f32 %v1143, %v1227
        %v1229 = vpop.f32.mrb[0].mxu0
        %v1230 = vpop.f32.mrb[0].mxu0
        %v1231 = vpop.f32.mrb[0].mxu0
        %1232 = vdwg.mxu0
        %vm1233 = vcmp.gt.f32.partialorder %v1228, 0.0
        %v1234 = vmul.f32 %v1228, 0.01
        %v1235 = vsel %vm1233, %v1228, %v1234
        %v1236 = vpack.c.bf16 %v1235, %v1235
        %v1237 = vld [vmem:[#allocation12] sm:$0xf]
        %v1238 = vld [vmem:[#allocation12 + $0x4] sm:$0xf]
        %v1239 = vld [vmem:[#allocation12 + $0x8] sm:$0xf]
        %v1240 = vld [vmem:[#allocation12 + $0xc] sm:$0xf]
        %v1241 = vld [vmem:[#allocation12 + $0x10] sm:$0xf]
        %v1242 = vld [vmem:[#allocation12 + $0x14] sm:$0xf]
        %v1243 = vld [vmem:[#allocation12 + $0x18] sm:$0xf]
        %v1244 = vld [vmem:[#allocation12 + $0x1c] sm:$0xf]
        %v1245 = vld [vmem:[#allocation12 + $0x20] sm:$0xf]
        %v1246 = vld [vmem:[#allocation12 + $0x24] sm:$0xf]
        %v1247 = vld [vmem:[#allocation12 + $0x28] sm:$0xf]
        %v1248 = vld [vmem:[#allocation12 + $0x2c] sm:$0xf]
        %v1249 = vld [vmem:[#allocation12 + $0x30] sm:$0xf]
        %v1250 = vld [vmem:[#allocation12 + $0x34] sm:$0xf]
        %v1251 = vld [vmem:[#allocation12 + $0x38] sm:$0xf]
        %v1252 = vld [vmem:[#allocation12 + $0x3c] sm:$0xf]
        %v1253 = vld [vmem:[%s11] sm:$0x1]
        %v1255 = vlaneseq
        %v1256 = vshrl.u32 %v1255, 7
        %v1257 = vsub.s32 0, %v1256
        %v1258 = vrot.slane %v1253, %v1257
        %v1276 = vunpack.c.l.b16 %v1237
        %v1277 = vunpack.c.l.b16 %v1238
        %v1278 = vunpack.c.l.b16 %v1239
        %v1279 = vunpack.c.l.b16 %v1240
        %v1280 = vunpack.c.l.b16 %v1241
        %v1281 = vunpack.c.l.b16 %v1242
        %v1282 = vunpack.c.l.b16 %v1243
        %v1283 = vunpack.c.l.b16 %v1244
        %v1284 = vunpack.c.l.b16 %v1245
        %v1285 = vunpack.c.l.b16 %v1246
        %v1286 = vunpack.c.l.b16 %v1247
        %v1287 = vunpack.c.l.b16 %v1248
        %v1288 = vunpack.c.l.b16 %v1249
        %v1289 = vunpack.c.l.b16 %v1250
        %v1290 = vunpack.c.l.b16 %v1251
        %v1291 = vunpack.c.l.b16 %v1252
        %v1292 = vpack.c.b16 %v1277, %v1276
        %v1293 = vpack.c.b16 %v1279, %v1278
        %v1294 = vpack.c.b16 %v1281, %v1280
        %v1295 = vpack.c.b16 %v1283, %v1282
        %v1296 = vpack.c.b16 %v1285, %v1284
        %v1297 = vpack.c.b16 %v1287, %v1286
        %v1298 = vpack.c.b16 %v1289, %v1288
        %v1299 = vpack.c.b16 %v1291, %v1290
        %1308 = vmatprep.subr.bf16.mxu0 0
        %1309 = vmatpush1.bf16.msra.mxu0 %v1292
        %1310 = vmatprep.subr.bf16.mxu0 0
        %1311 = vmatpush1.bf16.msra.mxu0 %v1293
        %1312 = vmatprep.subr.bf16.mxu0 0
        %1313 = vmatpush1.bf16.msra.mxu0 %v1294
        %1314 = vmatprep.subr.bf16.mxu0 0
        %1315 = vmatpush1.bf16.msra.mxu0 %v1295
        %1316 = vmatprep.subr.bf16.mxu0 0
        %1317 = vmatpush1.bf16.msra.mxu0 %v1296
        %1318 = vmatprep.subr.bf16.mxu0 0
        %1319 = vmatpush1.bf16.msra.mxu0 %v1297
        %1320 = vmatprep.subr.bf16.mxu0 0
        %1321 = vmatpush1.bf16.msra.mxu0 %v1298
        %1322 = vmatprep.subr.bf16.mxu0 0
        %1323 = vmatpush1.bf16.msra.mxu0 %v1299
        %1324 = vmatprep.subr.bf16.mxu0 0
        %1325 = vmatpush1.bf16.msra.mxu0 0
        %1326 = vmatprep.subr.bf16.mxu0 0
        %1327 = vmatpush1.bf16.msra.mxu0 0
        %1328 = vmatprep.subr.bf16.mxu0 0
        %1329 = vmatpush1.bf16.msra.mxu0 0
        %1330 = vmatprep.subr.bf16.mxu0 0
        %1331 = vmatpush1.bf16.msra.mxu0 0
        %1332 = vmatprep.subr.bf16.mxu0 0
        %1333 = vmatpush1.bf16.msra.mxu0 0
        %1334 = vmatprep.subr.bf16.mxu0 0
        %1335 = vmatpush1.bf16.msra.mxu0 0
        %1336 = vmatprep.subr.bf16.mxu0 0
        %1337 = vmatpush1.bf16.msra.mxu0 0
        %1338 = vmatprep.subr.bf16.mxu0 0
        %1339 = vmatpush1.bf16.msra.mxu0 0
        %1340 = vmatprep.mubr.bf16.mxu0 0
        %1341 = vmatmul.mubr.bf16.gmra.mrb[0].mxu0 %v1236
        %v1342 = vpop.f32.mrb[0].mxu0
        %v1343 = vadd.f32 %v1258, %v1342
        %v1344 = vpop.f32.mrb[0].mxu0
        %v1345 = vpop.f32.mrb[0].mxu0
        %v1346 = vpop.f32.mrb[0].mxu0
        %1347 = vdwg.mxu0
        %vm1348 = vcmp.gt.f32.partialorder %v1343, 0.0
        %v1349 = vmul.f32 %v1343, 0.01
        %v1350 = vsel %vm1348, %v1343, %v1349
        %v1351 = vpack.c.bf16 %v1350, %v1350
        %v1352 = vld [vmem:[#allocation13] sm:$0xf]
        %v1353 = vld [vmem:[#allocation13 + $0x4] sm:$0xf]
        %v1354 = vld [vmem:[#allocation13 + $0x8] sm:$0xf]
        %v1355 = vld [vmem:[#allocation13 + $0xc] sm:$0xf]
        %v1356 = vld [vmem:[#allocation13 + $0x10] sm:$0xf]
        %v1357 = vld [vmem:[#allocation13 + $0x14] sm:$0xf]
        %v1358 = vld [vmem:[#allocation13 + $0x18] sm:$0xf]
        %v1359 = vld [vmem:[#allocation13 + $0x1c] sm:$0xf]
        %v1360 = vld [vmem:[#allocation13 + $0x20] sm:$0xf]
        %v1361 = vld [vmem:[#allocation13 + $0x24] sm:$0xf]
        %v1362 = vld [vmem:[#allocation13 + $0x28] sm:$0xf]
        %v1363 = vld [vmem:[#allocation13 + $0x2c] sm:$0xf]
        %v1364 = vld [vmem:[#allocation13 + $0x30] sm:$0xf]
        %v1365 = vld [vmem:[#allocation13 + $0x34] sm:$0xf]
        %v1366 = vld [vmem:[#allocation13 + $0x38] sm:$0xf]
        %v1367 = vld [vmem:[#allocation13 + $0x3c] sm:$0xf]
        %v1368 = vld [vmem:[%s13] sm:$0x1]
        %v1370 = vlaneseq
        %v1371 = vshrl.u32 %v1370, 7
        %v1372 = vsub.s32 0, %v1371
        %v1373 = vrot.slane %v1368, %v1372
        %v1391 = vunpack.c.l.b16 %v1352
        %v1392 = vunpack.c.l.b16 %v1353
        %v1393 = vunpack.c.l.b16 %v1354
        %v1394 = vunpack.c.l.b16 %v1355
        %v1395 = vunpack.c.l.b16 %v1356
        %v1396 = vunpack.c.l.b16 %v1357
        %v1397 = vunpack.c.l.b16 %v1358
        %v1398 = vunpack.c.l.b16 %v1359
        %v1399 = vunpack.c.l.b16 %v1360
        %v1400 = vunpack.c.l.b16 %v1361
        %v1401 = vunpack.c.l.b16 %v1362
        %v1402 = vunpack.c.l.b16 %v1363
        %v1403 = vunpack.c.l.b16 %v1364
        %v1404 = vunpack.c.l.b16 %v1365
        %v1405 = vunpack.c.l.b16 %v1366
        %v1406 = vunpack.c.l.b16 %v1367
        %v1407 = vpack.c.b16 %v1392, %v1391
        %v1408 = vpack.c.b16 %v1394, %v1393
        %v1409 = vpack.c.b16 %v1396, %v1395
        %v1410 = vpack.c.b16 %v1398, %v1397
        %v1411 = vpack.c.b16 %v1400, %v1399
        %v1412 = vpack.c.b16 %v1402, %v1401
        %v1413 = vpack.c.b16 %v1404, %v1403
        %v1414 = vpack.c.b16 %v1406, %v1405
        %1423 = vmatprep.subr.bf16.mxu0 0
        %1424 = vmatpush1.bf16.msra.mxu0 %v1407
        %1425 = vmatprep.subr.bf16.mxu0 0
        %1426 = vmatpush1.bf16.msra.mxu0 %v1408
        %1427 = vmatprep.subr.bf16.mxu0 0
        %1428 = vmatpush1.bf16.msra.mxu0 %v1409
        %1429 = vmatprep.subr.bf16.mxu0 0
        %1430 = vmatpush1.bf16.msra.mxu0 %v1410
        %1431 = vmatprep.subr.bf16.mxu0 0
        %1432 = vmatpush1.bf16.msra.mxu0 %v1411
        %1433 = vmatprep.subr.bf16.mxu0 0
        %1434 = vmatpush1.bf16.msra.mxu0 %v1412
        %1435 = vmatprep.subr.bf16.mxu0 0
        %1436 = vmatpush1.bf16.msra.mxu0 %v1413
        %1437 = vmatprep.subr.bf16.mxu0 0
        %1438 = vmatpush1.bf16.msra.mxu0 %v1414
        %1439 = vmatprep.subr.bf16.mxu0 0
        %1440 = vmatpush1.bf16.msra.mxu0 0
        %1441 = vmatprep.subr.bf16.mxu0 0
        %1442 = vmatpush1.bf16.msra.mxu0 0
        %1443 = vmatprep.subr.bf16.mxu0 0
        %1444 = vmatpush1.bf16.msra.mxu0 0
        %1445 = vmatprep.subr.bf16.mxu0 0
        %1446 = vmatpush1.bf16.msra.mxu0 0
        %1447 = vmatprep.subr.bf16.mxu0 0
        %1448 = vmatpush1.bf16.msra.mxu0 0
        %1449 = vmatprep.subr.bf16.mxu0 0
        %1450 = vmatpush1.bf16.msra.mxu0 0
        %1451 = vmatprep.subr.bf16.mxu0 0
        %1452 = vmatpush1.bf16.msra.mxu0 0
        %1453 = vmatprep.subr.bf16.mxu0 0
        %1454 = vmatpush1.bf16.msra.mxu0 0
        %1455 = vmatprep.mubr.bf16.mxu0 0
        %1456 = vmatmul.mubr.bf16.gmra.mrb[0].mxu0 %v1351
        %v1457 = vpop.f32.mrb[0].mxu0
        %v1458 = vadd.f32 %v1373, %v1457
        %v1459 = vpop.f32.mrb[0].mxu0
        %v1460 = vpop.f32.mrb[0].mxu0
        %v1461 = vpop.f32.mrb[0].mxu0
        %1462 = vdwg.mxu0
        %vm1463 = vcmp.gt.f32.partialorder %v1458, 0.0
        %v1464 = vmul.f32 %v1458, 0.01
        %v1465 = vsel %vm1463, %v1458, %v1464
        %v1466 = vpack.c.bf16 %v1465, %v1465
        %v1467 = vld [vmem:[#allocation15] sm:$0xf]
        %v1468 = vld [vmem:[#allocation15 + $0x4] sm:$0xf]
        %v1469 = vld [vmem:[#allocation15 + $0x8] sm:$0xf]
        %v1470 = vld [vmem:[#allocation15 + $0xc] sm:$0xf]
        %v1471 = vld [vmem:[#allocation15 + $0x10] sm:$0xf]
        %v1472 = vld [vmem:[#allocation15 + $0x14] sm:$0xf]
        %v1473 = vld [vmem:[#allocation15 + $0x18] sm:$0xf]
        %v1474 = vld [vmem:[#allocation15 + $0x1c] sm:$0xf]
        %v1475 = vld [vmem:[#allocation15 + $0x20] sm:$0xf]
        %v1476 = vld [vmem:[#allocation15 + $0x24] sm:$0xf]
        %v1477 = vld [vmem:[#allocation15 + $0x28] sm:$0xf]
        %v1478 = vld [vmem:[#allocation15 + $0x2c] sm:$0xf]
        %v1479 = vld [vmem:[#allocation15 + $0x30] sm:$0xf]
        %v1480 = vld [vmem:[#allocation15 + $0x34] sm:$0xf]
        %v1481 = vld [vmem:[#allocation15 + $0x38] sm:$0xf]
        %v1482 = vld [vmem:[#allocation15 + $0x3c] sm:$0xf]
        %v1483 = vld [vmem:[%s15] sm:$0x1]
        %v1485 = vlaneseq
        %v1486 = vshrl.u32 %v1485, 7
        %v1487 = vsub.s32 0, %v1486
        %v1488 = vrot.slane %v1483, %v1487
        %v1506 = vunpack.c.l.b16 %v1467
        %v1507 = vunpack.c.l.b16 %v1468
        %v1508 = vunpack.c.l.b16 %v1469
        %v1509 = vunpack.c.l.b16 %v1470
        %v1510 = vunpack.c.l.b16 %v1471
        %v1511 = vunpack.c.l.b16 %v1472
        %v1512 = vunpack.c.l.b16 %v1473
        %v1513 = vunpack.c.l.b16 %v1474
        %v1514 = vunpack.c.l.b16 %v1475
        %v1515 = vunpack.c.l.b16 %v1476
        %v1516 = vunpack.c.l.b16 %v1477
        %v1517 = vunpack.c.l.b16 %v1478
        %v1518 = vunpack.c.l.b16 %v1479
        %v1519 = vunpack.c.l.b16 %v1480
        %v1520 = vunpack.c.l.b16 %v1481
        %v1521 = vunpack.c.l.b16 %v1482
        %v1522 = vpack.c.b16 %v1507, %v1506
        %v1523 = vpack.c.b16 %v1509, %v1508
        %v1524 = vpack.c.b16 %v1511, %v1510
        %v1525 = vpack.c.b16 %v1513, %v1512
        %v1526 = vpack.c.b16 %v1515, %v1514
        %v1527 = vpack.c.b16 %v1517, %v1516
        %v1528 = vpack.c.b16 %v1519, %v1518
        %v1529 = vpack.c.b16 %v1521, %v1520
        %1538 = vmatprep.subr.bf16.mxu0 0
        %1539 = vmatpush1.bf16.msra.mxu0 %v1522
        %1540 = vmatprep.subr.bf16.mxu0 0
        %1541 = vmatpush1.bf16.msra.mxu0 %v1523
        %1542 = vmatprep.subr.bf16.mxu0 0
        %1543 = vmatpush1.bf16.msra.mxu0 %v1524
        %1544 = vmatprep.subr.bf16.mxu0 0
        %1545 = vmatpush1.bf16.msra.mxu0 %v1525
        %1546 = vmatprep.subr.bf16.mxu0 0
        %1547 = vmatpush1.bf16.msra.mxu0 %v1526
        %1548 = vmatprep.subr.bf16.mxu0 0
        %1549 = vmatpush1.bf16.msra.mxu0 %v1527
        %1550 = vmatprep.subr.bf16.mxu0 0
        %1551 = vmatpush1.bf16.msra.mxu0 %v1528
        %1552 = vmatprep.subr.bf16.mxu0 0
        %1553 = vmatpush1.bf16.msra.mxu0 %v1529
        %1554 = vmatprep.subr.bf16.mxu0 0
        %1555 = vmatpush1.bf16.msra.mxu0 0
        %1556 = vmatprep.subr.bf16.mxu0 0
        %1557 = vmatpush1.bf16.msra.mxu0 0
        %1558 = vmatprep.subr.bf16.mxu0 0
        %1559 = vmatpush1.bf16.msra.mxu0 0
        %1560 = vmatprep.subr.bf16.mxu0 0
        %1561 = vmatpush1.bf16.msra.mxu0 0
        %1562 = vmatprep.subr.bf16.mxu0 0
        %1563 = vmatpush1.bf16.msra.mxu0 0
        %1564 = vmatprep.subr.bf16.mxu0 0
        %1565 = vmatpush1.bf16.msra.mxu0 0
        %1566 = vmatprep.subr.bf16.mxu0 0
        %1567 = vmatpush1.bf16.msra.mxu0 0
        %1568 = vmatprep.subr.bf16.mxu0 0
        %1569 = vmatpush1.bf16.msra.mxu0 0
        %1570 = vmatprep.mubr.bf16.mxu0 0
        %1571 = vmatmul.mubr.bf16.gmra.mrb[0].mxu0 %v1466
        %v1572 = vpop.f32.mrb[0].mxu0
        %v1573 = vadd.f32 %v1488, %v1572
        %v1574 = vpop.f32.mrb[0].mxu0
        %v1575 = vpop.f32.mrb[0].mxu0
        %v1576 = vpop.f32.mrb[0].mxu0
        %1577 = vdwg.mxu0
        %vm1578 = vcmp.gt.f32.partialorder %v1573, 0.0
        %v1579 = vmul.f32 %v1573, 0.01
        %v1580 = vsel %vm1578, %v1573, %v1579
        %v1581 = vpack.c.bf16 %v1580, %v1580
        %v1582 = vld [vmem:[#allocation16] sm:$0xf]
        %v1583 = vld [vmem:[#allocation16 + $0x4] sm:$0xf]
        %v1584 = vld [vmem:[#allocation16 + $0x8] sm:$0xf]
        %v1585 = vld [vmem:[#allocation16 + $0xc] sm:$0xf]
        %v1586 = vld [vmem:[#allocation16 + $0x10] sm:$0xf]
        %v1587 = vld [vmem:[#allocation16 + $0x14] sm:$0xf]
        %v1588 = vld [vmem:[#allocation16 + $0x18] sm:$0xf]
        %v1589 = vld [vmem:[#allocation16 + $0x1c] sm:$0xf]
        %v1590 = vld [vmem:[#allocation16 + $0x20] sm:$0xf]
        %v1591 = vld [vmem:[#allocation16 + $0x24] sm:$0xf]
        %v1592 = vld [vmem:[#allocation16 + $0x28] sm:$0xf]
        %v1593 = vld [vmem:[#allocation16 + $0x2c] sm:$0xf]
        %v1594 = vld [vmem:[#allocation16 + $0x30] sm:$0xf]
        %v1595 = vld [vmem:[#allocation16 + $0x34] sm:$0xf]
        %v1596 = vld [vmem:[#allocation16 + $0x38] sm:$0xf]
        %v1597 = vld [vmem:[#allocation16 + $0x3c] sm:$0xf]
        %v1598 = vld [vmem:[%s17] sm:$0x1]
        %v1600 = vlaneseq
        %v1601 = vshrl.u32 %v1600, 7
        %v1602 = vsub.s32 0, %v1601
        %v1603 = vrot.slane %v1598, %v1602
        %v1621 = vunpack.c.l.b16 %v1582
        %v1622 = vunpack.c.l.b16 %v1583
        %v1623 = vunpack.c.l.b16 %v1584
        %v1624 = vunpack.c.l.b16 %v1585
        %v1625 = vunpack.c.l.b16 %v1586
        %v1626 = vunpack.c.l.b16 %v1587
        %v1627 = vunpack.c.l.b16 %v1588
        %v1628 = vunpack.c.l.b16 %v1589
        %v1629 = vunpack.c.l.b16 %v1590
        %v1630 = vunpack.c.l.b16 %v1591
        %v1631 = vunpack.c.l.b16 %v1592
        %v1632 = vunpack.c.l.b16 %v1593
        %v1633 = vunpack.c.l.b16 %v1594
        %v1634 = vunpack.c.l.b16 %v1595
        %v1635 = vunpack.c.l.b16 %v1596
        %v1636 = vunpack.c.l.b16 %v1597
        %v1637 = vpack.c.b16 %v1622, %v1621
        %v1638 = vpack.c.b16 %v1624, %v1623
        %v1639 = vpack.c.b16 %v1626, %v1625
        %v1640 = vpack.c.b16 %v1628, %v1627
        %v1641 = vpack.c.b16 %v1630, %v1629
        %v1642 = vpack.c.b16 %v1632, %v1631
        %v1643 = vpack.c.b16 %v1634, %v1633
        %v1644 = vpack.c.b16 %v1636, %v1635
        %1653 = vmatprep.subr.bf16.mxu0 0
        %1654 = vmatpush1.bf16.msra.mxu0 %v1637
        %1655 = vmatprep.subr.bf16.mxu0 0
        %1656 = vmatpush1.bf16.msra.mxu0 %v1638
        %1657 = vmatprep.subr.bf16.mxu0 0
        %1658 = vmatpush1.bf16.msra.mxu0 %v1639
        %1659 = vmatprep.subr.bf16.mxu0 0
        %1660 = vmatpush1.bf16.msra.mxu0 %v1640
        %1661 = vmatprep.subr.bf16.mxu0 0
        %1662 = vmatpush1.bf16.msra.mxu0 %v1641
        %1663 = vmatprep.subr.bf16.mxu0 0
        %1664 = vmatpush1.bf16.msra.mxu0 %v1642
        %1665 = vmatprep.subr.bf16.mxu0 0
        %1666 = vmatpush1.bf16.msra.mxu0 %v1643
        %1667 = vmatprep.subr.bf16.mxu0 0
        %1668 = vmatpush1.bf16.msra.mxu0 %v1644
        %1669 = vmatprep.subr.bf16.mxu0 0
        %1670 = vmatpush1.bf16.msra.mxu0 0
        %1671 = vmatprep.subr.bf16.mxu0 0
        %1672 = vmatpush1.bf16.msra.mxu0 0
        %1673 = vmatprep.subr.bf16.mxu0 0
        %1674 = vmatpush1.bf16.msra.mxu0 0
        %1675 = vmatprep.subr.bf16.mxu0 0
        %1676 = vmatpush1.bf16.msra.mxu0 0
        %1677 = vmatprep.subr.bf16.mxu0 0
        %1678 = vmatpush1.bf16.msra.mxu0 0
        %1679 = vmatprep.subr.bf16.mxu0 0
        %1680 = vmatpush1.bf16.msra.mxu0 0
        %1681 = vmatprep.subr.bf16.mxu0 0
        %1682 = vmatpush1.bf16.msra.mxu0 0
        %1683 = vmatprep.subr.bf16.mxu0 0
        %1684 = vmatpush1.bf16.msra.mxu0 0
        %1685 = vmatprep.mubr.bf16.mxu0 0
        %1686 = vmatmul.mubr.bf16.gmra.mrb[0].mxu0 %v1581
        %v1687 = vpop.f32.mrb[0].mxu0
        %v1688 = vadd.f32 %v1603, %v1687
        %v1689 = vpop.f32.mrb[0].mxu0
        %v1690 = vpop.f32.mrb[0].mxu0
        %v1691 = vpop.f32.mrb[0].mxu0
        %1692 = vdwg.mxu0
        %v1693 = vmax.f32 %v1688, 0.0
        %v1694 = vlaneseq
        %v1695 = vshrl.u32 %v1694, 7
        %v1696 = vlaneseq
        %v1697 = vand.u32 %v1696, 127
        %v1698 = vstv %s669
        %vm1699 = vcmp.lt.s32.totalorder %v1695, %v1698
        %vm1700 = vcmp.lt.s32.totalorder %v1697, 8
        %vm1701 = vmand %vm1699, %vm1700
        %v1702 = vsel %vm1701, %v1693, -1e+30
        %1703 = vmax.xlane.f32.xlu0 %v1702
        %v1704 = vpop.xlane.xlu0 %1703
        %v1705 = vrot.slane %v1704, 4
        %v1706 = vmax.f32 %v1704, %v1705
        %v1707 = vrot.slane %v1706, 2
        %v1708 = vmax.f32 %v1706, %v1707
        %v1709 = vrot.slane %v1708, 1
        %v1710 = vmax.f32 %v1708, %v1709
        %s1711 = vtos %v1710
        %v1712 = vstv %s1711
        %v1713 = vsub.f32 %v1693, %v1712
        %v1714 = vmul.f32 %v1713, 1.442695
        %v1715 = vpow.pop %v1714
        %v1716 = vsel %vm1701, %v1715, 0.0
        %1717 = vadd.xlane.f32.xlu0 %v1716
        %v1718 = vpop.xlane.xlu0 %1717
        %v1719 = vrot.slane %v1718, 4
        %v1720 = vadd.f32 %v1718, %v1719
        %v1721 = vrot.slane %v1720, 2
        %v1722 = vadd.f32 %v1720, %v1721
        %v1723 = vrot.slane %v1722, 1
        %v1724 = vadd.f32 %v1722, %v1723
        %s1725 = vtos %v1724
        %v1726 = vstv %s1725
        %v1727 = vrcp.pop %v1726
        %v1728 = vmul.f32 %v1716, %v1727
        %1729 = vst [vmem:[%s663] sm:$0xff] %v1728
        %s1730 = sand.u32 %s413, 1
        %s1731 = scalar_lea.sflag [#allocation6], %s1730
        %s1732 = sand.u32 %s413, 1
        %s1733 = smul.addr %s1732, 8
        %s1734 = scalar_lea.vmem [#allocation18], %s1733
        // Predicated region
        $region121: #{_actor_core.1} parent=87 // pred_check
          %p1735 = pneg %p423
        $region122: #{_actor_core.1} parent=87 // pred_check_branch
          %1737 = sbr.rel (%p1735) target = $region124
        $region123: #{_actor_core.1} parent=87 // pred_region
          %s1739 = ssub.s32 128, 128
          %1740 = vsyncadd %s1731, %s1739
          %s1741 = smul.addr %s43, 128
          %s1742 = scalar_lea.hbm %s18, %s1741
          %s1744 = sshll.u32 %s1734, 4
          %s1745 = int_to_ptr.vmem [resolvable:$true] %s1744
          %1747 = dma.vmem_to_hbm [thread:$0]  %s1745, 128, %s1742, %s1731
        $region124: #{_actor_core.1} parent=87 // pred_fallthru
          _
      $region88: #{_actor_core.1} parent=5 // pred_fallthru
        _
      %p1748 = scmp.le.s32.totalorder 2, %s38
      // Predicated region
      $region125: #{_actor_core.1} parent=5 // pred_check
        %p1749 = pneg %p1748
      $region126: #{_actor_core.1} parent=5 // pred_check_branch
        %1751 = sbr.rel (%p1749) target = $region128
      $region127: #{_actor_core.1} parent=5 // pred_region
        %s1752 = ssub.s32 %s38, 2
        // Predicated region
        $region129: #{_actor_core.1} parent=127 // pred_check
          %p1753 = pneg %p429
        $region130: #{_actor_core.1} parent=127 // pred_check_branch
          %1755 = sbr.rel (%p1753) target = $region132
        $region131: #{_actor_core.1} parent=127 // pred_region
          %s1756 = sand.u32 %s414, 1
          %s1757 = scalar_lea.sflag [#allocation6], %s1756
          %s1758 = sand.u32 %s414, 1
          %s1759 = smul.addr %s1758, 8
          %s1760 = scalar_lea.vmem [#allocation18], %s1759
          %1761 = dma.done %s1757, 128
        $region132: #{_actor_core.1} parent=127 // pred_fallthru
          _
      $region128: #{_actor_core.1} parent=5 // pred_fallthru
        _
    $region6: #{_actor_core.1} parent=1 // loop_footer
      %s42 = sadd.s32 1, %s38
    $region7: #{_actor_core.1} parent=1 // loop_footer_branch
      %37 = sbr.rel target = $region3
    $region8: #{_actor_core.1} parent=1 // loop_exit
      _
    %1762 = vsyncpa [#allocation5], 1
    %s1763 = scalar_lea.sflag [#allocation5], 1
    %1764 = vsyncpa %s1763, 1
    %1765 = vsyncpa [#allocation8], 1
    %1766 = vsyncpa [#allocation11], 1
    %1767 = vsyncpa [#allocation14], 1
    %1768 = vsyncpa [#allocation17], 1
    %1769 = vsyncpa [#allocation6], 1
    %s1770 = scalar_lea.sflag [#allocation6], 1
    %1771 = vsyncpa %s1770, 1

</llo_original>
